<compile_context>
chip_gen: v5e
topology: v5e:2x2
jax: 0.10.0
libtpu: 0.0.40
codegen_flags: <defaults>
</compile_context>

<pallas_src>
import math
import functools

import jax
import jax.numpy as jnp
from jax import lax
from jax.experimental import pallas as pl
from jax.experimental.pallas import tpu as pltpu


# ----------------------------------------------------------------------------
# helpers
# ----------------------------------------------------------------------------
def _sigmoid_via_tanh(x):
    # sigmoid(x) == 0.5 * tanh(0.5 * x) + 0.5  (exact); single EUP op.
    return 0.5 * jnp.tanh(0.5 * x) + 0.5


def _pick_time_chunk(t, target=32):
    """Largest divisor of t that is <= target and sublane-friendly."""
    if t <= target:
        return t
    for c in range(target, 0, -1):
        if t % c == 0 and c % 8 == 0:
            return c
    return t  # fall back: whole sequence in one chunk


def _pick_tile(dim, target, quantum):
    """Largest divisor of dim <= target that is a multiple of quantum."""
    if dim <= target:
        return dim
    for c in range(target, 0, -1):
        if dim % c == 0 and c % quantum == 0:
            return c
    return dim


# ----------------------------------------------------------------------------
# LSTM single-layer kernel (chunked recurrence).
#   grid = (T // Tc,)   -- sequential ("arbitrary")
#   x block     : (B, Tc, E)  batch-major, index (0, t, 0)
#   y block     : (B, Tc, H)  batch-major, index (0, t, 0)
#   hn/cn block : (B, H) constant index -> resident carry across chunks
#   scratch     : gx (Tc, B, 4H) hoisted input-projection, y_sc (Tc, B, H)
# ----------------------------------------------------------------------------
def _lstm_layer_kernel(x_ref, h0_ref, c0_ref, wih_ref, whh_ref, b_ref,
                       y_ref, hn_ref, cn_ref,
                       gx_sc, y_sc):
    t = pl.program_id(0)

    @pl.when(t == 0)
    def _():
        hn_ref[...] = h0_ref[...]
        cn_ref[...] = c0_ref[...]

    B, Tc, E = x_ref.shape
    H = hn_ref.shape[-1]

    # --- Hoisted input projection for the whole chunk: one large MXU matmul.
    # Transpose the (small) x chunk to time-major in VMEM so per-step reads
    # are leading-axis slices of the scratch.
    x_tm = jnp.transpose(x_ref[...], (1, 0, 2)).reshape(Tc * B, E)   # (Tc*B, E)
    gx = jnp.dot(x_tm, wih_ref[...],
                 preferred_element_type=jnp.float32) + b_ref[...]    # (Tc*B, 4H)
    gx_sc[...] = gx.reshape(Tc, B, 4 * H)

    whh = whh_ref[...]                                               # (H, 4H)

    # --- Sequential recurrence over the chunk; (h, c) carried in vregs.
    def step(i, carry):
        h, c = carry
        gates = gx_sc[i] + jnp.dot(h, whh,
                                   preferred_element_type=jnp.float32)  # (B, 4H)
        i_g = _sigmoid_via_tanh(gates[:, 0:H])
        f_g = _sigmoid_via_tanh(gates[:, H:2 * H])
        g_g = jnp.tanh(gates[:, 2 * H:3 * H])
        o_g = _sigmoid_via_tanh(gates[:, 3 * H:4 * H])
        c_new = f_g * c + i_g * g_g
        h_new = o_g * jnp.tanh(c_new)
        y_sc[i] = h_new
        return h_new, c_new

    h_fin, c_fin = lax.fori_loop(0, Tc, step,
                                 (hn_ref[...], cn_ref[...]), unroll=True)
    hn_ref[...] = h_fin
    cn_ref[...] = c_fin

    # One lane-dense batch-major writeback per chunk.
    y_ref[...] = jnp.transpose(y_sc[...], (1, 0, 2))


def lstm_layer(x_bte, h0, c0, w_ih, w_hh, bias):
    """One LSTM layer, batch-major. x_bte: (B, T, E) f32.
    Returns (y (B,T,H), h_n (B,H), c_n (B,H))."""
    B, T, E = x_bte.shape
    H = h0.shape[-1]
    Tc = _pick_time_chunk(T)
    n_chunks = T // Tc
    bias2d = bias.reshape(1, 4 * H)

    grid_spec = pltpu.PrefetchScalarGridSpec(
        num_scalar_prefetch=0,
        grid=(n_chunks,),
        in_specs=[
            pl.BlockSpec((B, Tc, E), lambda t: (0, t, 0)),    # x chunk
            pl.BlockSpec((B, H), lambda t: (0, 0)),           # h0
            pl.BlockSpec((B, H), lambda t: (0, 0)),           # c0
            pl.BlockSpec((E, 4 * H), lambda t: (0, 0)),       # W_ih (E, 4H)
            pl.BlockSpec((H, 4 * H), lambda t: (0, 0)),       # W_hh (H, 4H)
            pl.BlockSpec((1, 4 * H), lambda t: (0, 0)),       # bias
        ],
        out_specs=[
            pl.BlockSpec((B, Tc, H), lambda t: (0, t, 0)),    # y chunk
            pl.BlockSpec((B, H), lambda t: (0, 0)),           # h_n (resident carry)
            pl.BlockSpec((B, H), lambda t: (0, 0)),           # c_n (resident carry)
        ],
        scratch_shapes=[
            pltpu.VMEM((Tc, B, 4 * H), jnp.float32),          # hoisted gate chunk
            pltpu.VMEM((Tc, B, H), jnp.float32),              # y chunk (time-major)
        ],
    )

    cost = pl.CostEstimate(
        flops=int(2 * T * B * (E + H) * 4 * H),
        transcendentals=int(T * B * 5 * H),
        bytes_accessed=int(4 * (B * T * E + B * T * H
                                + (E + H) * 4 * H + 4 * H + 4 * B * H)),
    )

    y, hn, cn = pl.pallas_call(
        _lstm_layer_kernel,
        out_shape=(
            jax.ShapeDtypeStruct((B, T, H), jnp.float32),
            jax.ShapeDtypeStruct((B, H), jnp.float32),
            jax.ShapeDtypeStruct((B, H), jnp.float32),
        ),
        grid_spec=grid_spec,
        compiler_params=pltpu.CompilerParams(
            dimension_semantics=("arbitrary",)),              # sequential recurrence
        cost_estimate=cost,
    )(x_bte, h0, c0, w_ih, w_hh, bias2d)
    return y, hn, cn


# ----------------------------------------------------------------------------
# Final projection kernel: tiled (N, H) @ (H, V) + b, grid over (rows, vocab).
# ----------------------------------------------------------------------------
def _fc_kernel(x_ref, w_ref, b_ref, o_ref):
    o_ref[...] = (jnp.dot(x_ref[...], w_ref[...],
                          preferred_element_type=jnp.float32)
                  + b_ref[...])


def fc_layer(x2d, w_hv, b_v):
    N, H = x2d.shape
    V = w_hv.shape[-1]
    tn = _pick_tile(N, 256, 8)      # row tile
    tv = _pick_tile(V, 512, 128)    # vocab tile

    cost = pl.CostEstimate(
        flops=int(2 * N * H * V),
        transcendentals=0,
        bytes_accessed=int(4 * (N * H + H * V + V + N * V)),
    )

    return pl.pallas_call(
        _fc_kernel,
        out_shape=jax.ShapeDtypeStruct((N, V), jnp.float32),
        grid_spec=pltpu.PrefetchScalarGridSpec(
            num_scalar_prefetch=0,
            grid=(N // tn, V // tv),
            in_specs=[
                pl.BlockSpec((tn, H), lambda i, j: (i, 0)),
                pl.BlockSpec((H, tv), lambda i, j: (0, j)),
                pl.BlockSpec((1, tv), lambda i, j: (0, j)),
            ],
            out_specs=pl.BlockSpec((tn, tv), lambda i, j: (i, j)),
        ),
        compiler_params=pltpu.CompilerParams(
            dimension_semantics=("parallel", "parallel")),    # megacore-shardable
        cost_estimate=cost,
    )(x2d, w_hv, b_v.reshape(1, V))


# ----------------------------------------------------------------------------
# Full model forward (glue in plain JAX: embedding gather, reshapes, param
# packing; all matmul / recurrence / elementwise hot paths in Pallas).
# ----------------------------------------------------------------------------
def init_params(key, vocab_size, hid_dim, emb_dim, num_layers):
    k_other = 1.0 / math.sqrt(hid_dim)
    keys = jax.random.split(key, 2 + 6 * num_layers)
    params = {
        "embedding": jax.random.uniform(keys[0], (vocab_size, emb_dim),
                                        jnp.float32, -0.1, 0.1),
        "fc_w": jax.random.uniform(keys[1], (hid_dim, vocab_size),
                                   jnp.float32, -k_other, k_other),
        "fc_b": jnp.zeros((vocab_size,), jnp.float32),
        "lstm": [],
    }
    for l in range(num_layers):
        in_dim = emb_dim if l == 0 else hid_dim
        kk = keys[2 + 6 * l:2 + 6 * (l + 1)]
        # PyTorch stores W_ih as (4H, in); we store transposed (in, 4H).
        w_ih = jax.random.uniform(kk[0], (in_dim, 4 * hid_dim),
                                  jnp.float32, -k_other, k_other)
        w_hh = jax.random.uniform(kk[1], (hid_dim, 4 * hid_dim),
                                  jnp.float32, -k_other, k_other)
        b_ih = jax.random.uniform(kk[2], (4 * hid_dim,),
                                  jnp.float32, -k_other, k_other)
        b_hh = jax.random.uniform(kk[3], (4 * hid_dim,),
                                  jnp.float32, -k_other, k_other)
        params["lstm"].append((w_ih, w_hh, b_ih + b_hh))
    return params


@jax.jit
def lstm_lm_forward(params, src, hidden):
    """src: (B, T) int32 token ids. hidden = (h0, c0) each (L, B, H).
    Returns (prediction (B, T, V), (h_n, c_n))."""
    h0_all, c0_all = hidden
    # Embedding lookup (gather) + dropout(identity) -- XLA glue, batch-major.
    x = jnp.take(params["embedding"], src, axis=0)          # (B, T, E)

    hn_list, cn_list = [], []
    for l, (w_ih, w_hh, bias) in enumerate(params["lstm"]):
        x, hn, cn = lstm_layer(x, h0_all[l], c0_all[l], w_ih, w_hh, bias)
        hn_list.append(hn)
        cn_list.append(cn)
        # TODO(synk): inter-layer dropout (train mode only) not applied; eval semantics.

    B, T, H = x.shape
    logits2d = fc_layer(x.reshape(B * T, H), params["fc_w"], params["fc_b"])
    prediction = logits2d.reshape(B, T, -1)                  # (B, T, V) -- no transpose
    return prediction, (jnp.stack(hn_list, axis=0), jnp.stack(cn_list, axis=0))


# ----------------------------------------------------------------------------
# Pure-JAX reference (for a silent correctness check).
# ----------------------------------------------------------------------------
def _reference_forward(params, src, hidden):
    h_all, c_all = hidden
    x = jnp.take(params["embedding"], src, axis=0)           # (B, T, E)
    hs, cs = [], []
    for l, (w_ih, w_hh, bias) in enumerate(params["lstm"]):
        H = h_all.shape[-1]

        def step(carry, x_t):
            h, c = carry
            g = x_t @ w_ih + h @ w_hh + bias
            i = jax.nn.sigmoid(g[:, 0:H])
            f = jax.nn.sigmoid(g[:, H:2 * H])
            gg = jnp.tanh(g[:, 2 * H:3 * H])
            o = jax.nn.sigmoid(g[:, 3 * H:4 * H])
            c2 = f * c + i * gg
            h2 = o * jnp.tanh(c2)
            return (h2, c2), h2

        (hn, cn), ys = lax.scan(step, (h_all[l], c_all[l]),
                                jnp.transpose(x, (1, 0, 2)))
        x = jnp.transpose(ys, (1, 0, 2))
        hs.append(hn)
        cs.append(cn)
    logits = x @ params["fc_w"] + params["fc_b"]
    return logits, (jnp.stack(hs), jnp.stack(cs))


if __name__ == "__main__":
    vocab_size, hid_dim, emb_dim, num_layers = 64, 32, 32, 2
    batch, seq = 2, 8

    key = jax.random.PRNGKey(0)
    k_param, k_src = jax.random.split(key)
    params = init_params(k_param, vocab_size, hid_dim, emb_dim, num_layers)

    src = jax.random.randint(k_src, (batch, seq), 0, vocab_size, dtype=jnp.int32)
    h0 = jnp.zeros((num_layers, batch, hid_dim), jnp.float32)
    c0 = jnp.zeros((num_layers, batch, hid_dim), jnp.float32)

    prediction, (hn, cn) = lstm_lm_forward(params, src, (h0, c0))
    jax.block_until_ready((prediction, hn, cn))

    assert prediction.shape == (batch, seq, vocab_size)
    assert hn.shape == (num_layers, batch, hid_dim)
    assert cn.shape == (num_layers, batch, hid_dim)

    # Silent numerical check against the pure-JAX reference.
    ref_pred, (ref_hn, ref_cn) = _reference_forward(params, src, (h0, c0))
    assert jnp.allclose(prediction, ref_pred, atol=1e-4, rtol=1e-4)
    assert jnp.allclose(hn, ref_hn, atol=1e-4, rtol=1e-4)
    assert jnp.allclose(cn, ref_cn, atol=1e-4, rtol=1e-4)

    print("KERNEL_OK")
</pallas_src>

<mosaic_0001>
module attributes {stable_mosaic.version = 11 : i64} {
  func.func @_lstm_layer_kernel(%arg0: i32, %arg1: memref<2x8x32xf32, #tpu.memory_space<vmem>>, %arg2: memref<2x32xf32, #tpu.memory_space<vmem>>, %arg3: memref<2x32xf32, #tpu.memory_space<vmem>>, %arg4: memref<32x128xf32, #tpu.memory_space<vmem>>, %arg5: memref<32x128xf32, #tpu.memory_space<vmem>>, %arg6: memref<1x128xf32, #tpu.memory_space<vmem>>, %arg7: memref<2x8x32xf32, #tpu.memory_space<vmem>>, %arg8: memref<2x32xf32, #tpu.memory_space<vmem>>, %arg9: memref<2x32xf32, #tpu.memory_space<vmem>>, %arg10: memref<8x2x128xf32, #tpu.memory_space<vmem>>, %arg11: memref<8x2x32xf32, #tpu.memory_space<vmem>>) attributes {dimension_semantics = [#tpu.dimension_semantics<arbitrary>], iteration_bounds = array<i64: 1>, scalar_prefetch = 0 : i64, scratch_operands = 2 : i64, tpu.core_type = #tpu.core_type<tc>, window_params = [{transform_indices = @transform_0, window_bounds = array<i64: 2, 8, 32>}, {pipeline_mode = #tpu.pipeline_mode<synchronous>, transform_indices = @transform_1, window_bounds = array<i64: 2, 32>}, {pipeline_mode = #tpu.pipeline_mode<synchronous>, transform_indices = @transform_2, window_bounds = array<i64: 2, 32>}, {pipeline_mode = #tpu.pipeline_mode<synchronous>, transform_indices = @transform_3, window_bounds = array<i64: 32, 128>}, {pipeline_mode = #tpu.pipeline_mode<synchronous>, transform_indices = @transform_4, window_bounds = array<i64: 32, 128>}, {pipeline_mode = #tpu.pipeline_mode<synchronous>, transform_indices = @transform_5, window_bounds = array<i64: 1, 128>}, {transform_indices = @transform_6, window_bounds = array<i64: 2, 8, 32>}, {pipeline_mode = #tpu.pipeline_mode<synchronous>, transform_indices = @transform_7, window_bounds = array<i64: 2, 32>}, {pipeline_mode = #tpu.pipeline_mode<synchronous>, transform_indices = @transform_8, window_bounds = array<i64: 2, 32>}]} {
    %c0_i32 = arith.constant 0 : i32
    %0 = arith.cmpi eq, %arg0, %c0_i32 : i32
    %1 = arith.extui %0 : i1 to i32
    %c0_i32_0 = arith.constant 0 : i32
    %2 = arith.cmpi ne, %1, %c0_i32_0 : i32
    scf.if %2 {
      %c0_139 = arith.constant 0 : index
      %c0_140 = arith.constant 0 : index
      %341 = vector.load %arg2[%c0_139, %c0_140] : memref<2x32xf32, #tpu.memory_space<vmem>>, vector<2x32xf32>
      %c0_141 = arith.constant 0 : index
      %c0_142 = arith.constant 0 : index
      %342 = vector.load %arg8[%c0_141, %c0_142] : memref<2x32xf32, #tpu.memory_space<vmem>>, vector<2x32xf32>
      tpu.vector_store %arg8[%c0_141, %c0_142], %341 {strides = array<i32>} : memref<2x32xf32, #tpu.memory_space<vmem>>, vector<2x32xf32>,
      %c0_143 = arith.constant 0 : index
      %c0_144 = arith.constant 0 : index
      %343 = vector.load %arg3[%c0_143, %c0_144] : memref<2x32xf32, #tpu.memory_space<vmem>>, vector<2x32xf32>
      %c0_145 = arith.constant 0 : index
      %c0_146 = arith.constant 0 : index
      %344 = vector.load %arg9[%c0_145, %c0_146] : memref<2x32xf32, #tpu.memory_space<vmem>>, vector<2x32xf32>
      tpu.vector_store %arg9[%c0_145, %c0_146], %343 {strides = array<i32>} : memref<2x32xf32, #tpu.memory_space<vmem>>, vector<2x32xf32>,
    } else {
    }
    %c0 = arith.constant 0 : index
    %c0_1 = arith.constant 0 : index
    %c0_2 = arith.constant 0 : index
    %3 = vector.load %arg1[%c0, %c0_1, %c0_2] : memref<2x8x32xf32, #tpu.memory_space<vmem>>, vector<2x8x32xf32>
    %4 = tpu.transpose %3, [1, 0, 2] : vector<2x8x32xf32> -> vector<8x2x32xf32>
    %5 = vector.shape_cast %4 : vector<8x2x32xf32> to vector<16x32xf32>
    %c0_3 = arith.constant 0 : index
    %c0_4 = arith.constant 0 : index
    %6 = vector.load %arg4[%c0_3, %c0_4] : memref<32x128xf32, #tpu.memory_space<vmem>>, vector<32x128xf32>
    %cst = arith.constant dense<0.000000e+00> : vector<16x128xf32>
    %7 = tpu.matmul %5, %6, %cst {dimension_numbers = #tpu.dot_dimension_numbers<[1], [0], [0], [1], [0, 0, 1, 1], [], []>} : vector<16x32xf32>, vector<32x128xf32>, vector<16x128xf32> -> vector<16x128xf32>
    %c0_5 = arith.constant 0 : index
    %c0_6 = arith.constant 0 : index
    %8 = vector.load %arg6[%c0_5, %c0_6] : memref<1x128xf32, #tpu.memory_space<vmem>>, vector<1x128xf32>
    %9 = vector.broadcast %8 : vector<1x128xf32> to vector<16x128xf32>
    %10 = arith.addf %7, %9 : vector<16x128xf32>
    %11 = vector.shape_cast %10 : vector<16x128xf32> to vector<8x2x128xf32>
    %c0_7 = arith.constant 0 : index
    %c0_8 = arith.constant 0 : index
    %c0_9 = arith.constant 0 : index
    %12 = vector.load %arg10[%c0_7, %c0_8, %c0_9] : memref<8x2x128xf32, #tpu.memory_space<vmem>>, vector<8x2x128xf32>
    tpu.vector_store %arg10[%c0_7, %c0_8, %c0_9], %11 {strides = array<i32>} : memref<8x2x128xf32, #tpu.memory_space<vmem>>, vector<8x2x128xf32>,
    %c0_10 = arith.constant 0 : index
    %c0_11 = arith.constant 0 : index
    %13 = vector.load %arg5[%c0_10, %c0_11] : memref<32x128xf32, #tpu.memory_space<vmem>>, vector<32x128xf32>
    %c0_12 = arith.constant 0 : index
    %c0_13 = arith.constant 0 : index
    %14 = vector.load %arg8[%c0_12, %c0_13] : memref<2x32xf32, #tpu.memory_space<vmem>>, vector<2x32xf32>
    %c0_14 = arith.constant 0 : index
    %c0_15 = arith.constant 0 : index
    %15 = vector.load %arg9[%c0_14, %c0_15] : memref<2x32xf32, #tpu.memory_space<vmem>>, vector<2x32xf32>
    %c0_i32_16 = arith.constant 0 : i32
    %16 = arith.index_cast %c0_i32_16 : i32 to index
    %c0_17 = arith.constant 0 : index
    %c0_18 = arith.constant 0 : index
    %17 = vector.load %arg10[%16, %c0_17, %c0_18] : memref<8x2x128xf32, #tpu.memory_space<vmem>>, vector<1x2x128xf32>
    %18 = vector.shape_cast %17 : vector<1x2x128xf32> to vector<2x128xf32>
    %cst_19 = arith.constant dense<0.000000e+00> : vector<2x128xf32>
    %19 = tpu.matmul %14, %13, %cst_19 {dimension_numbers = #tpu.dot_dimension_numbers<[1], [0], [0], [1], [0, 0, 1, 1], [], []>} : vector<2x32xf32>, vector<32x128xf32>, vector<2x128xf32> -> vector<2x128xf32>
    %20 = arith.addf %18, %19 : vector<2x128xf32>
    %21 = vector.extract_strided_slice %20 {offsets = [0, 0], sizes = [2, 32], strides = [1, 1]} : vector<2x128xf32> to vector<2x32xf32>
    %cst_20 = arith.constant 5.000000e-01 : f32
    %22 = vector.broadcast %cst_20 : f32 to vector<2x32xf32>
    %23 = arith.mulf %22, %21 : vector<2x32xf32>
    %24 = math.tanh %23 : vector<2x32xf32>
    %cst_21 = arith.constant 5.000000e-01 : f32
    %25 = vector.broadcast %cst_21 : f32 to vector<2x32xf32>
    %26 = arith.mulf %25, %24 : vector<2x32xf32>
    %cst_22 = arith.constant 5.000000e-01 : f32
    %27 = vector.broadcast %cst_22 : f32 to vector<2x32xf32>
    %28 = arith.addf %26, %27 : vector<2x32xf32>
    %29 = vector.extract_strided_slice %20 {offsets = [0, 32], sizes = [2, 32], strides = [1, 1]} : vector<2x128xf32> to vector<2x32xf32>
    %cst_23 = arith.constant 5.000000e-01 : f32
    %30 = vector.broadcast %cst_23 : f32 to vector<2x32xf32>
    %31 = arith.mulf %30, %29 : vector<2x32xf32>
    %32 = math.tanh %31 : vector<2x32xf32>
    %cst_24 = arith.constant 5.000000e-01 : f32
    %33 = vector.broadcast %cst_24 : f32 to vector<2x32xf32>
    %34 = arith.mulf %33, %32 : vector<2x32xf32>
    %cst_25 = arith.constant 5.000000e-01 : f32
    %35 = vector.broadcast %cst_25 : f32 to vector<2x32xf32>
    %36 = arith.addf %34, %35 : vector<2x32xf32>
    %37 = vector.extract_strided_slice %20 {offsets = [0, 64], sizes = [2, 32], strides = [1, 1]} : vector<2x128xf32> to vector<2x32xf32>
    %38 = math.tanh %37 : vector<2x32xf32>
    %39 = vector.extract_strided_slice %20 {offsets = [0, 96], sizes = [2, 32], strides = [1, 1]} : vector<2x128xf32> to vector<2x32xf32>
    %cst_26 = arith.constant 5.000000e-01 : f32
    %40 = vector.broadcast %cst_26 : f32 to vector<2x32xf32>
    %41 = arith.mulf %40, %39 : vector<2x32xf32>
    %42 = math.tanh %41 : vector<2x32xf32>
    %cst_27 = arith.constant 5.000000e-01 : f32
    %43 = vector.broadcast %cst_27 : f32 to vector<2x32xf32>
    %44 = arith.mulf %43, %42 : vector<2x32xf32>
    %cst_28 = arith.constant 5.000000e-01 : f32
    %45 = vector.broadcast %cst_28 : f32 to vector<2x32xf32>
    %46 = arith.addf %44, %45 : vector<2x32xf32>
    %47 = arith.mulf %36, %15 : vector<2x32xf32>
    %48 = arith.mulf %28, %38 : vector<2x32xf32>
    %49 = arith.addf %47, %48 : vector<2x32xf32>
    %50 = math.tanh %49 : vector<2x32xf32>
    %51 = arith.mulf %46, %50 : vector<2x32xf32>
    %52 = arith.index_cast %c0_i32_16 : i32 to index
    %c0_29 = arith.constant 0 : index
    %c0_30 = arith.constant 0 : index
    %53 = vector.load %arg11[%52, %c0_29, %c0_30] : memref<8x2x32xf32, #tpu.memory_space<vmem>>, vector<1x2x32xf32>
    %54 = vector.shape_cast %53 : vector<1x2x32xf32> to vector<2x32xf32>
    %55 = vector.shape_cast %51 : vector<2x32xf32> to vector<1x2x32xf32>
    tpu.vector_store %arg11[%52, %c0_29, %c0_30], %55 {strides = array<i32>} : memref<8x2x32xf32, #tpu.memory_space<vmem>>, vector<1x2x32xf32>,
    %c1_i32 = arith.constant 1 : i32
    %56 = arith.index_cast %c1_i32 : i32 to index
    %c0_31 = arith.constant 0 : index
    %c0_32 = arith.constant 0 : index
    %57 = vector.load %arg10[%56, %c0_31, %c0_32] : memref<8x2x128xf32, #tpu.memory_space<vmem>>, vector<1x2x128xf32>
    %58 = vector.shape_cast %57 : vector<1x2x128xf32> to vector<2x128xf32>
    %cst_33 = arith.constant dense<0.000000e+00> : vector<2x128xf32>
    %59 = tpu.matmul %51, %13, %cst_33 {dimension_numbers = #tpu.dot_dimension_numbers<[1], [0], [0], [1], [0, 0, 1, 1], [], []>} : vector<2x32xf32>, vector<32x128xf32>, vector<2x128xf32> -> vector<2x128xf32>
    %60 = arith.addf %58, %59 : vector<2x128xf32>
    %61 = vector.extract_strided_slice %60 {offsets = [0, 0], sizes = [2, 32], strides = [1, 1]} : vector<2x128xf32> to vector<2x32xf32>
    %cst_34 = arith.constant 5.000000e-01 : f32
    %62 = vector.broadcast %cst_34 : f32 to vector<2x32xf32>
    %63 = arith.mulf %62, %61 : vector<2x32xf32>
    %64 = math.tanh %63 : vector<2x32xf32>
    %cst_35 = arith.constant 5.000000e-01 : f32
    %65 = vector.broadcast %cst_35 : f32 to vector<2x32xf32>
    %66 = arith.mulf %65, %64 : vector<2x32xf32>
    %cst_36 = arith.constant 5.000000e-01 : f32
    %67 = vector.broadcast %cst_36 : f32 to vector<2x32xf32>
    %68 = arith.addf %66, %67 : vector<2x32xf32>
    %69 = vector.extract_strided_slice %60 {offsets = [0, 32], sizes = [2, 32], strides = [1, 1]} : vector<2x128xf32> to vector<2x32xf32>
    %cst_37 = arith.constant 5.000000e-01 : f32
    %70 = vector.broadcast %cst_37 : f32 to vector<2x32xf32>
    %71 = arith.mulf %70, %69 : vector<2x32xf32>
    %72 = math.tanh %71 : vector<2x32xf32>
    %cst_38 = arith.constant 5.000000e-01 : f32
    %73 = vector.broadcast %cst_38 : f32 to vector<2x32xf32>
    %74 = arith.mulf %73, %72 : vector<2x32xf32>
    %cst_39 = arith.constant 5.000000e-01 : f32
    %75 = vector.broadcast %cst_39 : f32 to vector<2x32xf32>
    %76 = arith.addf %74, %75 : vector<2x32xf32>
    %77 = vector.extract_strided_slice %60 {offsets = [0, 64], sizes = [2, 32], strides = [1, 1]} : vector<2x128xf32> to vector<2x32xf32>
    %78 = math.tanh %77 : vector<2x32xf32>
    %79 = vector.extract_strided_slice %60 {offsets = [0, 96], sizes = [2, 32], strides = [1, 1]} : vector<2x128xf32> to vector<2x32xf32>
    %cst_40 = arith.constant 5.000000e-01 : f32
    %80 = vector.broadcast %cst_40 : f32 to vector<2x32xf32>
    %81 = arith.mulf %80, %79 : vector<2x32xf32>
    %82 = math.tanh %81 : vector<2x32xf32>
    %cst_41 = arith.constant 5.000000e-01 : f32
    %83 = vector.broadcast %cst_41 : f32 to vector<2x32xf32>
    %84 = arith.mulf %83, %82 : vector<2x32xf32>
    %cst_42 = arith.constant 5.000000e-01 : f32
    %85 = vector.broadcast %cst_42 : f32 to vector<2x32xf32>
    %86 = arith.addf %84, %85 : vector<2x32xf32>
    %87 = arith.mulf %76, %49 : vector<2x32xf32>
    %88 = arith.mulf %68, %78 : vector<2x32xf32>
    %89 = arith.addf %87, %88 : vector<2x32xf32>
    %90 = math.tanh %89 : vector<2x32xf32>
    %91 = arith.mulf %86, %90 : vector<2x32xf32>
    %92 = arith.index_cast %c1_i32 : i32 to index
    %c0_43 = arith.constant 0 : index
    %c0_44 = arith.constant 0 : index
    %93 = vector.load %arg11[%92, %c0_43, %c0_44] : memref<8x2x32xf32, #tpu.memory_space<vmem>>, vector<1x2x32xf32>
    %94 = vector.shape_cast %93 : vector<1x2x32xf32> to vector<2x32xf32>
    %95 = vector.shape_cast %91 : vector<2x32xf32> to vector<1x2x32xf32>
    tpu.vector_store %arg11[%92, %c0_43, %c0_44], %95 {strides = array<i32>} : memref<8x2x32xf32, #tpu.memory_space<vmem>>, vector<1x2x32xf32>,
    %c2_i32 = arith.constant 2 : i32
    %96 = arith.index_cast %c2_i32 : i32 to index
    %c0_45 = arith.constant 0 : index
    %c0_46 = arith.constant 0 : index
    %97 = vector.load %arg10[%96, %c0_45, %c0_46] : memref<8x2x128xf32, #tpu.memory_space<vmem>>, vector<1x2x128xf32>
    %98 = vector.shape_cast %97 : vector<1x2x128xf32> to vector<2x128xf32>
    %cst_47 = arith.constant dense<0.000000e+00> : vector<2x128xf32>
    %99 = tpu.matmul %91, %13, %cst_47 {dimension_numbers = #tpu.dot_dimension_numbers<[1], [0], [0], [1], [0, 0, 1, 1], [], []>} : vector<2x32xf32>, vector<32x128xf32>, vector<2x128xf32> -> vector<2x128xf32>
    %100 = arith.addf %98, %99 : vector<2x128xf32>
    %101 = vector.extract_strided_slice %100 {offsets = [0, 0], sizes = [2, 32], strides = [1, 1]} : vector<2x128xf32> to vector<2x32xf32>
    %cst_48 = arith.constant 5.000000e-01 : f32
    %102 = vector.broadcast %cst_48 : f32 to vector<2x32xf32>
    %103 = arith.mulf %102, %101 : vector<2x32xf32>
    %104 = math.tanh %103 : vector<2x32xf32>
    %cst_49 = arith.constant 5.000000e-01 : f32
    %105 = vector.broadcast %cst_49 : f32 to vector<2x32xf32>
    %106 = arith.mulf %105, %104 : vector<2x32xf32>
    %cst_50 = arith.constant 5.000000e-01 : f32
    %107 = vector.broadcast %cst_50 : f32 to vector<2x32xf32>
    %108 = arith.addf %106, %107 : vector<2x32xf32>
    %109 = vector.extract_strided_slice %100 {offsets = [0, 32], sizes = [2, 32], strides = [1, 1]} : vector<2x128xf32> to vector<2x32xf32>
    %cst_51 = arith.constant 5.000000e-01 : f32
    %110 = vector.broadcast %cst_51 : f32 to vector<2x32xf32>
    %111 = arith.mulf %110, %109 : vector<2x32xf32>
    %112 = math.tanh %111 : vector<2x32xf32>
    %cst_52 = arith.constant 5.000000e-01 : f32
    %113 = vector.broadcast %cst_52 : f32 to vector<2x32xf32>
    %114 = arith.mulf %113, %112 : vector<2x32xf32>
    %cst_53 = arith.constant 5.000000e-01 : f32
    %115 = vector.broadcast %cst_53 : f32 to vector<2x32xf32>
    %116 = arith.addf %114, %115 : vector<2x32xf32>
    %117 = vector.extract_strided_slice %100 {offsets = [0, 64], sizes = [2, 32], strides = [1, 1]} : vector<2x128xf32> to vector<2x32xf32>
    %118 = math.tanh %117 : vector<2x32xf32>
    %119 = vector.extract_strided_slice %100 {offsets = [0, 96], sizes = [2, 32], strides = [1, 1]} : vector<2x128xf32> to vector<2x32xf32>
    %cst_54 = arith.constant 5.000000e-01 : f32
    %120 = vector.broadcast %cst_54 : f32 to vector<2x32xf32>
    %121 = arith.mulf %120, %119 : vector<2x32xf32>
    %122 = math.tanh %121 : vector<2x32xf32>
    %cst_55 = arith.constant 5.000000e-01 : f32
    %123 = vector.broadcast %cst_55 : f32 to vector<2x32xf32>
    %124 = arith.mulf %123, %122 : vector<2x32xf32>
    %cst_56 = arith.constant 5.000000e-01 : f32
    %125 = vector.broadcast %cst_56 : f32 to vector<2x32xf32>
    %126 = arith.addf %124, %125 : vector<2x32xf32>
    %127 = arith.mulf %116, %89 : vector<2x32xf32>
    %128 = arith.mulf %108, %118 : vector<2x32xf32>
    %129 = arith.addf %127, %128 : vector<2x32xf32>
    %130 = math.tanh %129 : vector<2x32xf32>
    %131 = arith.mulf %126, %130 : vector<2x32xf32>
    %132 = arith.index_cast %c2_i32 : i32 to index
    %c0_57 = arith.constant 0 : index
    %c0_58 = arith.constant 0 : index
    %133 = vector.load %arg11[%132, %c0_57, %c0_58] : memref<8x2x32xf32, #tpu.memory_space<vmem>>, vector<1x2x32xf32>
    %134 = vector.shape_cast %133 : vector<1x2x32xf32> to vector<2x32xf32>
    %135 = vector.shape_cast %131 : vector<2x32xf32> to vector<1x2x32xf32>
    tpu.vector_store %arg11[%132, %c0_57, %c0_58], %135 {strides = array<i32>} : memref<8x2x32xf32, #tpu.memory_space<vmem>>, vector<1x2x32xf32>,
    %c3_i32 = arith.constant 3 : i32
    %136 = arith.index_cast %c3_i32 : i32 to index
    %c0_59 = arith.constant 0 : index
    %c0_60 = arith.constant 0 : index
    %137 = vector.load %arg10[%136, %c0_59, %c0_60] : memref<8x2x128xf32, #tpu.memory_space<vmem>>, vector<1x2x128xf32>
    %138 = vector.shape_cast %137 : vector<1x2x128xf32> to vector<2x128xf32>
    %cst_61 = arith.constant dense<0.000000e+00> : vector<2x128xf32>
    %139 = tpu.matmul %131, %13, %cst_61 {dimension_numbers = #tpu.dot_dimension_numbers<[1], [0], [0], [1], [0, 0, 1, 1], [], []>} : vector<2x32xf32>, vector<32x128xf32>, vector<2x128xf32> -> vector<2x128xf32>
    %140 = arith.addf %138, %139 : vector<2x128xf32>
    %141 = vector.extract_strided_slice %140 {offsets = [0, 0], sizes = [2, 32], strides = [1, 1]} : vector<2x128xf32> to vector<2x32xf32>
    %cst_62 = arith.constant 5.000000e-01 : f32
    %142 = vector.broadcast %cst_62 : f32 to vector<2x32xf32>
    %143 = arith.mulf %142, %141 : vector<2x32xf32>
    %144 = math.tanh %143 : vector<2x32xf32>
    %cst_63 = arith.constant 5.000000e-01 : f32
    %145 = vector.broadcast %cst_63 : f32 to vector<2x32xf32>
    %146 = arith.mulf %145, %144 : vector<2x32xf32>
    %cst_64 = arith.constant 5.000000e-01 : f32
    %147 = vector.broadcast %cst_64 : f32 to vector<2x32xf32>
    %148 = arith.addf %146, %147 : vector<2x32xf32>
    %149 = vector.extract_strided_slice %140 {offsets = [0, 32], sizes = [2, 32], strides = [1, 1]} : vector<2x128xf32> to vector<2x32xf32>
    %cst_65 = arith.constant 5.000000e-01 : f32
    %150 = vector.broadcast %cst_65 : f32 to vector<2x32xf32>
    %151 = arith.mulf %150, %149 : vector<2x32xf32>
    %152 = math.tanh %151 : vector<2x32xf32>
    %cst_66 = arith.constant 5.000000e-01 : f32
    %153 = vector.broadcast %cst_66 : f32 to vector<2x32xf32>
    %154 = arith.mulf %153, %152 : vector<2x32xf32>
    %cst_67 = arith.constant 5.000000e-01 : f32
    %155 = vector.broadcast %cst_67 : f32 to vector<2x32xf32>
    %156 = arith.addf %154, %155 : vector<2x32xf32>
    %157 = vector.extract_strided_slice %140 {offsets = [0, 64], sizes = [2, 32], strides = [1, 1]} : vector<2x128xf32> to vector<2x32xf32>
    %158 = math.tanh %157 : vector<2x32xf32>
    %159 = vector.extract_strided_slice %140 {offsets = [0, 96], sizes = [2, 32], strides = [1, 1]} : vector<2x128xf32> to vector<2x32xf32>
    %cst_68 = arith.constant 5.000000e-01 : f32
    %160 = vector.broadcast %cst_68 : f32 to vector<2x32xf32>
    %161 = arith.mulf %160, %159 : vector<2x32xf32>
    %162 = math.tanh %161 : vector<2x32xf32>
    %cst_69 = arith.constant 5.000000e-01 : f32
    %163 = vector.broadcast %cst_69 : f32 to vector<2x32xf32>
    %164 = arith.mulf %163, %162 : vector<2x32xf32>
    %cst_70 = arith.constant 5.000000e-01 : f32
    %165 = vector.broadcast %cst_70 : f32 to vector<2x32xf32>
    %166 = arith.addf %164, %165 : vector<2x32xf32>
    %167 = arith.mulf %156, %129 : vector<2x32xf32>
    %168 = arith.mulf %148, %158 : vector<2x32xf32>
    %169 = arith.addf %167, %168 : vector<2x32xf32>
    %170 = math.tanh %169 : vector<2x32xf32>
    %171 = arith.mulf %166, %170 : vector<2x32xf32>
    %172 = arith.index_cast %c3_i32 : i32 to index
    %c0_71 = arith.constant 0 : index
    %c0_72 = arith.constant 0 : index
    %173 = vector.load %arg11[%172, %c0_71, %c0_72] : memref<8x2x32xf32, #tpu.memory_space<vmem>>, vector<1x2x32xf32>
    %174 = vector.shape_cast %173 : vector<1x2x32xf32> to vector<2x32xf32>
    %175 = vector.shape_cast %171 : vector<2x32xf32> to vector<1x2x32xf32>
    tpu.vector_store %arg11[%172, %c0_71, %c0_72], %175 {strides = array<i32>} : memref<8x2x32xf32, #tpu.memory_space<vmem>>, vector<1x2x32xf32>,
    %c4_i32 = arith.constant 4 : i32
    %176 = arith.index_cast %c4_i32 : i32 to index
    %c0_73 = arith.constant 0 : index
    %c0_74 = arith.constant 0 : index
    %177 = vector.load %arg10[%176, %c0_73, %c0_74] : memref<8x2x128xf32, #tpu.memory_space<vmem>>, vector<1x2x128xf32>
    %178 = vector.shape_cast %177 : vector<1x2x128xf32> to vector<2x128xf32>
    %cst_75 = arith.constant dense<0.000000e+00> : vector<2x128xf32>
    %179 = tpu.matmul %171, %13, %cst_75 {dimension_numbers = #tpu.dot_dimension_numbers<[1], [0], [0], [1], [0, 0, 1, 1], [], []>} : vector<2x32xf32>, vector<32x128xf32>, vector<2x128xf32> -> vector<2x128xf32>
    %180 = arith.addf %178, %179 : vector<2x128xf32>
    %181 = vector.extract_strided_slice %180 {offsets = [0, 0], sizes = [2, 32], strides = [1, 1]} : vector<2x128xf32> to vector<2x32xf32>
    %cst_76 = arith.constant 5.000000e-01 : f32
    %182 = vector.broadcast %cst_76 : f32 to vector<2x32xf32>
    %183 = arith.mulf %182, %181 : vector<2x32xf32>
    %184 = math.tanh %183 : vector<2x32xf32>
    %cst_77 = arith.constant 5.000000e-01 : f32
    %185 = vector.broadcast %cst_77 : f32 to vector<2x32xf32>
    %186 = arith.mulf %185, %184 : vector<2x32xf32>
    %cst_78 = arith.constant 5.000000e-01 : f32
    %187 = vector.broadcast %cst_78 : f32 to vector<2x32xf32>
    %188 = arith.addf %186, %187 : vector<2x32xf32>
    %189 = vector.extract_strided_slice %180 {offsets = [0, 32], sizes = [2, 32], strides = [1, 1]} : vector<2x128xf32> to vector<2x32xf32>
    %cst_79 = arith.constant 5.000000e-01 : f32
    %190 = vector.broadcast %cst_79 : f32 to vector<2x32xf32>
    %191 = arith.mulf %190, %189 : vector<2x32xf32>
    %192 = math.tanh %191 : vector<2x32xf32>
    %cst_80 = arith.constant 5.000000e-01 : f32
    %193 = vector.broadcast %cst_80 : f32 to vector<2x32xf32>
    %194 = arith.mulf %193, %192 : vector<2x32xf32>
    %cst_81 = arith.constant 5.000000e-01 : f32
    %195 = vector.broadcast %cst_81 : f32 to vector<2x32xf32>
    %196 = arith.addf %194, %195 : vector<2x32xf32>
    %197 = vector.extract_strided_slice %180 {offsets = [0, 64], sizes = [2, 32], strides = [1, 1]} : vector<2x128xf32> to vector<2x32xf32>
    %198 = math.tanh %197 : vector<2x32xf32>
    %199 = vector.extract_strided_slice %180 {offsets = [0, 96], sizes = [2, 32], strides = [1, 1]} : vector<2x128xf32> to vector<2x32xf32>
    %cst_82 = arith.constant 5.000000e-01 : f32
    %200 = vector.broadcast %cst_82 : f32 to vector<2x32xf32>
    %201 = arith.mulf %200, %199 : vector<2x32xf32>
    %202 = math.tanh %201 : vector<2x32xf32>
    %cst_83 = arith.constant 5.000000e-01 : f32
    %203 = vector.broadcast %cst_83 : f32 to vector<2x32xf32>
    %204 = arith.mulf %203, %202 : vector<2x32xf32>
    %cst_84 = arith.constant 5.000000e-01 : f32
    %205 = vector.broadcast %cst_84 : f32 to vector<2x32xf32>
    %206 = arith.addf %204, %205 : vector<2x32xf32>
    %207 = arith.mulf %196, %169 : vector<2x32xf32>
    %208 = arith.mulf %188, %198 : vector<2x32xf32>
    %209 = arith.addf %207, %208 : vector<2x32xf32>
    %210 = math.tanh %209 : vector<2x32xf32>
    %211 = arith.mulf %206, %210 : vector<2x32xf32>
    %212 = arith.index_cast %c4_i32 : i32 to index
    %c0_85 = arith.constant 0 : index
    %c0_86 = arith.constant 0 : index
    %213 = vector.load %arg11[%212, %c0_85, %c0_86] : memref<8x2x32xf32, #tpu.memory_space<vmem>>, vector<1x2x32xf32>
    %214 = vector.shape_cast %213 : vector<1x2x32xf32> to vector<2x32xf32>
    %215 = vector.shape_cast %211 : vector<2x32xf32> to vector<1x2x32xf32>
    tpu.vector_store %arg11[%212, %c0_85, %c0_86], %215 {strides = array<i32>} : memref<8x2x32xf32, #tpu.memory_space<vmem>>, vector<1x2x32xf32>,
    %c5_i32 = arith.constant 5 : i32
    %216 = arith.index_cast %c5_i32 : i32 to index
    %c0_87 = arith.constant 0 : index
    %c0_88 = arith.constant 0 : index
    %217 = vector.load %arg10[%216, %c0_87, %c0_88] : memref<8x2x128xf32, #tpu.memory_space<vmem>>, vector<1x2x128xf32>
    %218 = vector.shape_cast %217 : vector<1x2x128xf32> to vector<2x128xf32>
    %cst_89 = arith.constant dense<0.000000e+00> : vector<2x128xf32>
    %219 = tpu.matmul %211, %13, %cst_89 {dimension_numbers = #tpu.dot_dimension_numbers<[1], [0], [0], [1], [0, 0, 1, 1], [], []>} : vector<2x32xf32>, vector<32x128xf32>, vector<2x128xf32> -> vector<2x128xf32>
    %220 = arith.addf %218, %219 : vector<2x128xf32>
    %221 = vector.extract_strided_slice %220 {offsets = [0, 0], sizes = [2, 32], strides = [1, 1]} : vector<2x128xf32> to vector<2x32xf32>
    %cst_90 = arith.constant 5.000000e-01 : f32
    %222 = vector.broadcast %cst_90 : f32 to vector<2x32xf32>
    %223 = arith.mulf %222, %221 : vector<2x32xf32>
    %224 = math.tanh %223 : vector<2x32xf32>
    %cst_91 = arith.constant 5.000000e-01 : f32
    %225 = vector.broadcast %cst_91 : f32 to vector<2x32xf32>
    %226 = arith.mulf %225, %224 : vector<2x32xf32>
    %cst_92 = arith.constant 5.000000e-01 : f32
    %227 = vector.broadcast %cst_92 : f32 to vector<2x32xf32>
    %228 = arith.addf %226, %227 : vector<2x32xf32>
    %229 = vector.extract_strided_slice %220 {offsets = [0, 32], sizes = [2, 32], strides = [1, 1]} : vector<2x128xf32> to vector<2x32xf32>
    %cst_93 = arith.constant 5.000000e-01 : f32
    %230 = vector.broadcast %cst_93 : f32 to vector<2x32xf32>
    %231 = arith.mulf %230, %229 : vector<2x32xf32>
    %232 = math.tanh %231 : vector<2x32xf32>
    %cst_94 = arith.constant 5.000000e-01 : f32
    %233 = vector.broadcast %cst_94 : f32 to vector<2x32xf32>
    %234 = arith.mulf %233, %232 : vector<2x32xf32>
    %cst_95 = arith.constant 5.000000e-01 : f32
    %235 = vector.broadcast %cst_95 : f32 to vector<2x32xf32>
    %236 = arith.addf %234, %235 : vector<2x32xf32>
    %237 = vector.extract_strided_slice %220 {offsets = [0, 64], sizes = [2, 32], strides = [1, 1]} : vector<2x128xf32> to vector<2x32xf32>
    %238 = math.tanh %237 : vector<2x32xf32>
    %239 = vector.extract_strided_slice %220 {offsets = [0, 96], sizes = [2, 32], strides = [1, 1]} : vector<2x128xf32> to vector<2x32xf32>
    %cst_96 = arith.constant 5.000000e-01 : f32
    %240 = vector.broadcast %cst_96 : f32 to vector<2x32xf32>
    %241 = arith.mulf %240, %239 : vector<2x32xf32>
    %242 = math.tanh %241 : vector<2x32xf32>
    %cst_97 = arith.constant 5.000000e-01 : f32
    %243 = vector.broadcast %cst_97 : f32 to vector<2x32xf32>
    %244 = arith.mulf %243, %242 : vector<2x32xf32>
    %cst_98 = arith.constant 5.000000e-01 : f32
    %245 = vector.broadcast %cst_98 : f32 to vector<2x32xf32>
    %246 = arith.addf %244, %245 : vector<2x32xf32>
    %247 = arith.mulf %236, %209 : vector<2x32xf32>
    %248 = arith.mulf %228, %238 : vector<2x32xf32>
    %249 = arith.addf %247, %248 : vector<2x32xf32>
    %250 = math.tanh %249 : vector<2x32xf32>
    %251 = arith.mulf %246, %250 : vector<2x32xf32>
    %252 = arith.index_cast %c5_i32 : i32 to index
    %c0_99 = arith.constant 0 : index
    %c0_100 = arith.constant 0 : index
    %253 = vector.load %arg11[%252, %c0_99, %c0_100] : memref<8x2x32xf32, #tpu.memory_space<vmem>>, vector<1x2x32xf32>
    %254 = vector.shape_cast %253 : vector<1x2x32xf32> to vector<2x32xf32>
    %255 = vector.shape_cast %251 : vector<2x32xf32> to vector<1x2x32xf32>
    tpu.vector_store %arg11[%252, %c0_99, %c0_100], %255 {strides = array<i32>} : memref<8x2x32xf32, #tpu.memory_space<vmem>>, vector<1x2x32xf32>,
    %c6_i32 = arith.constant 6 : i32
    %256 = arith.index_cast %c6_i32 : i32 to index
    %c0_101 = arith.constant 0 : index
    %c0_102 = arith.constant 0 : index
    %257 = vector.load %arg10[%256, %c0_101, %c0_102] : memref<8x2x128xf32, #tpu.memory_space<vmem>>, vector<1x2x128xf32>
    %258 = vector.shape_cast %257 : vector<1x2x128xf32> to vector<2x128xf32>
    %cst_103 = arith.constant dense<0.000000e+00> : vector<2x128xf32>
    %259 = tpu.matmul %251, %13, %cst_103 {dimension_numbers = #tpu.dot_dimension_numbers<[1], [0], [0], [1], [0, 0, 1, 1], [], []>} : vector<2x32xf32>, vector<32x128xf32>, vector<2x128xf32> -> vector<2x128xf32>
    %260 = arith.addf %258, %259 : vector<2x128xf32>
    %261 = vector.extract_strided_slice %260 {offsets = [0, 0], sizes = [2, 32], strides = [1, 1]} : vector<2x128xf32> to vector<2x32xf32>
    %cst_104 = arith.constant 5.000000e-01 : f32
    %262 = vector.broadcast %cst_104 : f32 to vector<2x32xf32>
    %263 = arith.mulf %262, %261 : vector<2x32xf32>
    %264 = math.tanh %263 : vector<2x32xf32>
    %cst_105 = arith.constant 5.000000e-01 : f32
    %265 = vector.broadcast %cst_105 : f32 to vector<2x32xf32>
    %266 = arith.mulf %265, %264 : vector<2x32xf32>
    %cst_106 = arith.constant 5.000000e-01 : f32
    %267 = vector.broadcast %cst_106 : f32 to vector<2x32xf32>
    %268 = arith.addf %266, %267 : vector<2x32xf32>
    %269 = vector.extract_strided_slice %260 {offsets = [0, 32], sizes = [2, 32], strides = [1, 1]} : vector<2x128xf32> to vector<2x32xf32>
    %cst_107 = arith.constant 5.000000e-01 : f32
    %270 = vector.broadcast %cst_107 : f32 to vector<2x32xf32>
    %271 = arith.mulf %270, %269 : vector<2x32xf32>
    %272 = math.tanh %271 : vector<2x32xf32>
    %cst_108 = arith.constant 5.000000e-01 : f32
    %273 = vector.broadcast %cst_108 : f32 to vector<2x32xf32>
    %274 = arith.mulf %273, %272 : vector<2x32xf32>
    %cst_109 = arith.constant 5.000000e-01 : f32
    %275 = vector.broadcast %cst_109 : f32 to vector<2x32xf32>
    %276 = arith.addf %274, %275 : vector<2x32xf32>
    %277 = vector.extract_strided_slice %260 {offsets = [0, 64], sizes = [2, 32], strides = [1, 1]} : vector<2x128xf32> to vector<2x32xf32>
    %278 = math.tanh %277 : vector<2x32xf32>
    %279 = vector.extract_strided_slice %260 {offsets = [0, 96], sizes = [2, 32], strides = [1, 1]} : vector<2x128xf32> to vector<2x32xf32>
    %cst_110 = arith.constant 5.000000e-01 : f32
    %280 = vector.broadcast %cst_110 : f32 to vector<2x32xf32>
    %281 = arith.mulf %280, %279 : vector<2x32xf32>
    %282 = math.tanh %281 : vector<2x32xf32>
    %cst_111 = arith.constant 5.000000e-01 : f32
    %283 = vector.broadcast %cst_111 : f32 to vector<2x32xf32>
    %284 = arith.mulf %283, %282 : vector<2x32xf32>
    %cst_112 = arith.constant 5.000000e-01 : f32
    %285 = vector.broadcast %cst_112 : f32 to vector<2x32xf32>
    %286 = arith.addf %284, %285 : vector<2x32xf32>
    %287 = arith.mulf %276, %249 : vector<2x32xf32>
    %288 = arith.mulf %268, %278 : vector<2x32xf32>
    %289 = arith.addf %287, %288 : vector<2x32xf32>
    %290 = math.tanh %289 : vector<2x32xf32>
    %291 = arith.mulf %286, %290 : vector<2x32xf32>
    %292 = arith.index_cast %c6_i32 : i32 to index
    %c0_113 = arith.constant 0 : index
    %c0_114 = arith.constant 0 : index
    %293 = vector.load %arg11[%292, %c0_113, %c0_114] : memref<8x2x32xf32, #tpu.memory_space<vmem>>, vector<1x2x32xf32>
    %294 = vector.shape_cast %293 : vector<1x2x32xf32> to vector<2x32xf32>
    %295 = vector.shape_cast %291 : vector<2x32xf32> to vector<1x2x32xf32>
    tpu.vector_store %arg11[%292, %c0_113, %c0_114], %295 {strides = array<i32>} : memref<8x2x32xf32, #tpu.memory_space<vmem>>, vector<1x2x32xf32>,
    %c7_i32 = arith.constant 7 : i32
    %296 = arith.index_cast %c7_i32 : i32 to index
    %c0_115 = arith.constant 0 : index
    %c0_116 = arith.constant 0 : index
    %297 = vector.load %arg10[%296, %c0_115, %c0_116] : memref<8x2x128xf32, #tpu.memory_space<vmem>>, vector<1x2x128xf32>
    %298 = vector.shape_cast %297 : vector<1x2x128xf32> to vector<2x128xf32>
    %cst_117 = arith.constant dense<0.000000e+00> : vector<2x128xf32>
    %299 = tpu.matmul %291, %13, %cst_117 {dimension_numbers = #tpu.dot_dimension_numbers<[1], [0], [0], [1], [0, 0, 1, 1], [], []>} : vector<2x32xf32>, vector<32x128xf32>, vector<2x128xf32> -> vector<2x128xf32>
    %300 = arith.addf %298, %299 : vector<2x128xf32>
    %301 = vector.extract_strided_slice %300 {offsets = [0, 0], sizes = [2, 32], strides = [1, 1]} : vector<2x128xf32> to vector<2x32xf32>
    %cst_118 = arith.constant 5.000000e-01 : f32
    %302 = vector.broadcast %cst_118 : f32 to vector<2x32xf32>
    %303 = arith.mulf %302, %301 : vector<2x32xf32>
    %304 = math.tanh %303 : vector<2x32xf32>
    %cst_119 = arith.constant 5.000000e-01 : f32
    %305 = vector.broadcast %cst_119 : f32 to vector<2x32xf32>
    %306 = arith.mulf %305, %304 : vector<2x32xf32>
    %cst_120 = arith.constant 5.000000e-01 : f32
    %307 = vector.broadcast %cst_120 : f32 to vector<2x32xf32>
    %308 = arith.addf %306, %307 : vector<2x32xf32>
    %309 = vector.extract_strided_slice %300 {offsets = [0, 32], sizes = [2, 32], strides = [1, 1]} : vector<2x128xf32> to vector<2x32xf32>
    %cst_121 = arith.constant 5.000000e-01 : f32
    %310 = vector.broadcast %cst_121 : f32 to vector<2x32xf32>
    %311 = arith.mulf %310, %309 : vector<2x32xf32>
    %312 = math.tanh %311 : vector<2x32xf32>
    %cst_122 = arith.constant 5.000000e-01 : f32
    %313 = vector.broadcast %cst_122 : f32 to vector<2x32xf32>
    %314 = arith.mulf %313, %312 : vector<2x32xf32>
    %cst_123 = arith.constant 5.000000e-01 : f32
    %315 = vector.broadcast %cst_123 : f32 to vector<2x32xf32>
    %316 = arith.addf %314, %315 : vector<2x32xf32>
    %317 = vector.extract_strided_slice %300 {offsets = [0, 64], sizes = [2, 32], strides = [1, 1]} : vector<2x128xf32> to vector<2x32xf32>
    %318 = math.tanh %317 : vector<2x32xf32>
    %319 = vector.extract_strided_slice %300 {offsets = [0, 96], sizes = [2, 32], strides = [1, 1]} : vector<2x128xf32> to vector<2x32xf32>
    %cst_124 = arith.constant 5.000000e-01 : f32
    %320 = vector.broadcast %cst_124 : f32 to vector<2x32xf32>
    %321 = arith.mulf %320, %319 : vector<2x32xf32>
    %322 = math.tanh %321 : vector<2x32xf32>
    %cst_125 = arith.constant 5.000000e-01 : f32
    %323 = vector.broadcast %cst_125 : f32 to vector<2x32xf32>
    %324 = arith.mulf %323, %322 : vector<2x32xf32>
    %cst_126 = arith.constant 5.000000e-01 : f32
    %325 = vector.broadcast %cst_126 : f32 to vector<2x32xf32>
    %326 = arith.addf %324, %325 : vector<2x32xf32>
    %327 = arith.mulf %316, %289 : vector<2x32xf32>
    %328 = arith.mulf %308, %318 : vector<2x32xf32>
    %329 = arith.addf %327, %328 : vector<2x32xf32>
    %330 = math.tanh %329 : vector<2x32xf32>
    %331 = arith.mulf %326, %330 : vector<2x32xf32>
    %332 = arith.index_cast %c7_i32 : i32 to index
    %c0_127 = arith.constant 0 : index
    %c0_128 = arith.constant 0 : index
    %333 = vector.load %arg11[%332, %c0_127, %c0_128] : memref<8x2x32xf32, #tpu.memory_space<vmem>>, vector<1x2x32xf32>
    %334 = vector.shape_cast %333 : vector<1x2x32xf32> to vector<2x32xf32>
    %335 = vector.shape_cast %331 : vector<2x32xf32> to vector<1x2x32xf32>
    tpu.vector_store %arg11[%332, %c0_127, %c0_128], %335 {strides = array<i32>} : memref<8x2x32xf32, #tpu.memory_space<vmem>>, vector<1x2x32xf32>,
    %c8_i32 = arith.constant 8 : i32
    %c0_129 = arith.constant 0 : index
    %c0_130 = arith.constant 0 : index
    %336 = vector.load %arg8[%c0_129, %c0_130] : memref<2x32xf32, #tpu.memory_space<vmem>>, vector<2x32xf32>
    tpu.vector_store %arg8[%c0_129, %c0_130], %331 {strides = array<i32>} : memref<2x32xf32, #tpu.memory_space<vmem>>, vector<2x32xf32>,
    %c0_131 = arith.constant 0 : index
    %c0_132 = arith.constant 0 : index
    %337 = vector.load %arg9[%c0_131, %c0_132] : memref<2x32xf32, #tpu.memory_space<vmem>>, vector<2x32xf32>
    tpu.vector_store %arg9[%c0_131, %c0_132], %329 {strides = array<i32>} : memref<2x32xf32, #tpu.memory_space<vmem>>, vector<2x32xf32>,
    %c0_133 = arith.constant 0 : index
    %c0_134 = arith.constant 0 : index
    %c0_135 = arith.constant 0 : index
    %338 = vector.load %arg11[%c0_133, %c0_134, %c0_135] : memref<8x2x32xf32, #tpu.memory_space<vmem>>, vector<8x2x32xf32>
    %339 = tpu.transpose %338, [1, 0, 2] : vector<8x2x32xf32> -> vector<2x8x32xf32>
    %c0_136 = arith.constant 0 : index
    %c0_137 = arith.constant 0 : index
    %c0_138 = arith.constant 0 : index
    %340 = vector.load %arg7[%c0_136, %c0_137, %c0_138] : memref<2x8x32xf32, #tpu.memory_space<vmem>>, vector<2x8x32xf32>
    tpu.vector_store %arg7[%c0_136, %c0_137, %c0_138], %339 {strides = array<i32>} : memref<2x8x32xf32, #tpu.memory_space<vmem>>, vector<2x8x32xf32>,
    return
  }
  func.func @transform_0(%arg0: i32) -> (i32, i32, i32) {
    %c0_i32 = arith.constant 0 : i32
    %c0_i32_0 = arith.constant 0 : i32
    %c0_i32_1 = arith.constant 0 : i32
    return %c0_i32, %arg0, %c0_i32_0 : i32, i32, i32
  }
  func.func @transform_1(%arg0: i32) -> (i32, i32) {
    %c0_i32 = arith.constant 0 : i32
    %c0_i32_0 = arith.constant 0 : i32
    %c0_i32_1 = arith.constant 0 : i32
    return %c0_i32, %c0_i32_0 : i32, i32
  }
  func.func @transform_2(%arg0: i32) -> (i32, i32) {
    %c0_i32 = arith.constant 0 : i32
    %c0_i32_0 = arith.constant 0 : i32
    %c0_i32_1 = arith.constant 0 : i32
    return %c0_i32, %c0_i32_0 : i32, i32
  }
  func.func @transform_3(%arg0: i32) -> (i32, i32) {
    %c0_i32 = arith.constant 0 : i32
    %c0_i32_0 = arith.constant 0 : i32
    %c0_i32_1 = arith.constant 0 : i32
    return %c0_i32, %c0_i32_0 : i32, i32
  }
  func.func @transform_4(%arg0: i32) -> (i32, i32) {
    %c0_i32 = arith.constant 0 : i32
    %c0_i32_0 = arith.constant 0 : i32
    %c0_i32_1 = arith.constant 0 : i32
    return %c0_i32, %c0_i32_0 : i32, i32
  }
  func.func @transform_5(%arg0: i32) -> (i32, i32) {
    %c0_i32 = arith.constant 0 : i32
    %c0_i32_0 = arith.constant 0 : i32
    %c0_i32_1 = arith.constant 0 : i32
    return %c0_i32, %c0_i32_0 : i32, i32
  }
  func.func @transform_6(%arg0: i32) -> (i32, i32, i32) {
    %c0_i32 = arith.constant 0 : i32
    %c0_i32_0 = arith.constant 0 : i32
    %c0_i32_1 = arith.constant 0 : i32
    return %c0_i32, %arg0, %c0_i32_0 : i32, i32, i32
  }
  func.func @transform_7(%arg0: i32) -> (i32, i32) {
    %c0_i32 = arith.constant 0 : i32
    %c0_i32_0 = arith.constant 0 : i32
    %c0_i32_1 = arith.constant 0 : i32
    return %c0_i32, %c0_i32_0 : i32, i32
  }
  func.func @transform_8(%arg0: i32) -> (i32, i32) {
    %c0_i32 = arith.constant 0 : i32
    %c0_i32_0 = arith.constant 0 : i32
    %c0_i32_1 = arith.constant 0 : i32
    return %c0_i32, %c0_i32_0 : i32, i32
  }
}

module attributes {stable_mosaic.version = 11 : i64} {
  func.func @_fc_kernel(%arg0: i32, %arg1: i32, %arg2: memref<16x32xf32, #tpu.memory_space<vmem>>, %arg3: memref<32x64xf32, #tpu.memory_space<vmem>>, %arg4: memref<1x64xf32, #tpu.memory_space<vmem>>, %arg5: memref<16x64xf32, #tpu.memory_space<vmem>>) attributes {dimension_semantics = [#tpu.dimension_semantics<parallel>, #tpu.dimension_semantics<parallel>], iteration_bounds = array<i64: 1, 1>, scalar_prefetch = 0 : i64, scratch_operands = 0 : i64, tpu.core_type = #tpu.core_type<tc>, window_params = [{transform_indices = @transform_0, window_bounds = array<i64: 16, 32>}, {transform_indices = @transform_1, window_bounds = array<i64: 32, 64>}, {transform_indices = @transform_2, window_bounds = array<i64: 1, 64>}, {transform_indices = @transform_3, window_bounds = array<i64: 16, 64>}]} {
    %c0 = arith.constant 0 : index
    %c0_0 = arith.constant 0 : index
    %0 = vector.load %arg2[%c0, %c0_0] : memref<16x32xf32, #tpu.memory_space<vmem>>, vector<16x32xf32>
    %c0_1 = arith.constant 0 : index
    %c0_2 = arith.constant 0 : index
    %1 = vector.load %arg3[%c0_1, %c0_2] : memref<32x64xf32, #tpu.memory_space<vmem>>, vector<32x64xf32>
    %cst = arith.constant dense<0.000000e+00> : vector<16x64xf32>
    %2 = tpu.matmul %0, %1, %cst {dimension_numbers = #tpu.dot_dimension_numbers<[1], [0], [0], [1], [0, 0, 1, 1], [], []>} : vector<16x32xf32>, vector<32x64xf32>, vector<16x64xf32> -> vector<16x64xf32>
    %c0_3 = arith.constant 0 : index
    %c0_4 = arith.constant 0 : index
    %3 = vector.load %arg4[%c0_3, %c0_4] : memref<1x64xf32, #tpu.memory_space<vmem>>, vector<1x64xf32>
    %4 = vector.broadcast %3 : vector<1x64xf32> to vector<16x64xf32>
    %5 = arith.addf %2, %4 : vector<16x64xf32>
    %c0_5 = arith.constant 0 : index
    %c0_6 = arith.constant 0 : index
    %6 = vector.load %arg5[%c0_5, %c0_6] : memref<16x64xf32, #tpu.memory_space<vmem>>, vector<16x64xf32>
    tpu.vector_store %arg5[%c0_5, %c0_6], %5 {strides = array<i32>} : memref<16x64xf32, #tpu.memory_space<vmem>>, vector<16x64xf32>,
    return
  }
  func.func @transform_0(%arg0: i32, %arg1: i32) -> (i32, i32) {
    %c0_i32 = arith.constant 0 : i32
    %c0_i32_0 = arith.constant 0 : i32
    return %arg0, %c0_i32 : i32, i32
  }
  func.func @transform_1(%arg0: i32, %arg1: i32) -> (i32, i32) {
    %c0_i32 = arith.constant 0 : i32
    %c0_i32_0 = arith.constant 0 : i32
    return %c0_i32, %arg1 : i32, i32
  }
  func.func @transform_2(%arg0: i32, %arg1: i32) -> (i32, i32) {
    %c0_i32 = arith.constant 0 : i32
    %c0_i32_0 = arith.constant 0 : i32
    return %c0_i32, %arg1 : i32, i32
  }
  func.func @transform_3(%arg0: i32, %arg1: i32) -> (i32, i32) {
    %c0_i32 = arith.constant 0 : i32
    return %arg0, %arg1 : i32, i32
  }
}

</mosaic_0001>

<llo_original>
// kernel: lstm_lm_forward.5
$region0: #{lstm_lm_forward.5}
  #allocation0 [shape = 'u32[]', space=smem, size = 0x4, offset = 0x4, fixed_abs, tag = 'smem constant byte address 0x4 - core index']
  #allocation1 [shape = 'u32[72,128]{1,0:T(1,128)}', space=vmem, size = 0x9000, scoped, tag = 'internal scratch']
  %s0 = inlined_call_operand.vmem [shape: f32[16,32], index: 0, kind: input, shape index: {}]
  %s1 = inlined_call_operand.vmem [shape: f32[32,64], index: 1, kind: input, shape index: {}]
  %s2 = inlined_call_operand.vmem [shape: f32[1,64], index: 2, kind: input, shape index: {}]
  %s3 = inlined_call_operand.hbm [shape: f32[16,64], index: 3, kind: output, shape index: {}]
  %s4 = sld [smem:[#allocation0]]
  $region22: #{lstm_lm_forward.5} parent=0
    _
  %s6 = ssub.s32 1, %s4
  %s7 = scalar_select 0, %s6, %s4
  $region1: #{lstm_lm_forward.5} parent=0
    #allocation2 [shape = 'u8[8192]{0}', space=vmem, size = 0x2000, scoped, tag = 'output window, operand 0, single buffered']
    #allocation3 [shape = 's32[1]{0}', space=sflag, size = 0x4, scoped, tag = 'scoped memory for lstm_lm_forward.5']
    %8 = vsyncpa [#allocation3], 0
    // Predicated region
    $region2: #{lstm_lm_forward.5} parent=1 // pred_check
      _
    $region3: #{lstm_lm_forward.5} parent=1 // pred_check_branch
      %10 = sbr.rel (0) target = $region5
    $region4: #{lstm_lm_forward.5} parent=1 // pred_region
      _
    $region5: #{lstm_lm_forward.5} parent=1 // pred_fallthru
      _
    // Predicated region
    $region6: #{lstm_lm_forward.5} parent=1 // pred_check
      _
    $region7: #{lstm_lm_forward.5} parent=1 // pred_check_branch
      %12 = sbr.rel (0) target = $region9
    $region8: #{lstm_lm_forward.5} parent=1 // pred_region
      _
    $region9: #{lstm_lm_forward.5} parent=1 // pred_fallthru
      _
    // Predicated region
    $region10: #{lstm_lm_forward.5} parent=1 // pred_check
      _
    $region11: #{lstm_lm_forward.5} parent=1 // pred_check_branch
      %14 = sbr.rel (0) target = $region13
    $region12: #{lstm_lm_forward.5} parent=1 // pred_region
      _
    $region13: #{lstm_lm_forward.5} parent=1 // pred_fallthru
      _
    %v15 = vld [vmem:[%s0] sm:$0xff]
    %v16 = vld [vmem:[%s0 + $0x8] sm:$0xff]
    %v17 = vld [vmem:[%s1] sm:$0xff]
    %v18 = vld [vmem:[%s1 + $0x8] sm:$0xff]
    %v19 = vld [vmem:[%s1 + $0x10] sm:$0xff]
    %v20 = vld [vmem:[%s1 + $0x18] sm:$0xff]
    %v21 = vld [vmem:[%s2] sm:$0x1]
    %v23 = vperm.slane %v21, 0
    %vm25 = vcmask 261120
    %v27 = vsel %vm25, %v15, 0
    %v30 = vsel %vm25, %v16, 0
    %32 = vmatpush.msra.mxu0 0.0
    %33 = vmatpush.msra.mxu0 0.0
    %34 = vmatpush.msra.mxu0 0.0
    %35 = vmatpush.msra.mxu0 0.0
    %36 = vmatpush.msra.mxu0 0.0
    %37 = vmatpush.msra.mxu0 0.0
    %38 = vmatpush.msra.mxu0 0.0
    %39 = vmatpush.msra.mxu0 0.0
    %40 = vmatpush.msra.mxu0 0.0
    %41 = vmatpush.msra.mxu0 0.0
    %42 = vmatpush.msra.mxu0 0.0
    %43 = vmatpush.msra.mxu0 0.0
    %44 = vmatpush.msra.mxu0 %v20
    %45 = vmatpush.msra.mxu0 %v19
    %46 = vmatpush.msra.mxu0 %v18
    %47 = vmatpush.msra.mxu0 %v17
    %48 = vmatmul.f32.gmra.mxu0 %v27
    %v49 = vpop.f32.mrf.mxu0
    %v50 = vadd.f32 %v23, %v49
    %51 = vmatmul.f32.gmra.mxu0 %v30
    %v52 = vpop.f32.mrf.mxu0
    %v53 = vadd.f32 %v23, %v52
    %54 = vdwg.mxu0
    %vm55 = vcmask 523264
    %56 = vst.msk [vmem:[#allocation2] sm:$0xff] %vm55, %v50
    %57 = vst.msk [vmem:[#allocation2 + $0x8] sm:$0xff] %vm55, %v53
    // Predicated region
    $region14: #{lstm_lm_forward.5} parent=1 // pred_check
      _
    $region15: #{lstm_lm_forward.5} parent=1 // pred_check_branch
      %59 = sbr.rel (0) target = $region17
    $region16: #{lstm_lm_forward.5} parent=1 // pred_region
      %61 = vsyncadd [#allocation3], 0
      %s62 = sshll.u32 [#allocation2], 4
      %s63 = int_to_ptr.vmem [resolvable:$true] %s62
      %s64 = sshll.u32 %s3, 4
      %s65 = int_to_ptr.hbm [resolvable:$true] %s64
      %70 = dma.vmem_to_hbm [thread:$0]  %s63, 256, %s65, [#allocation3], 128, 128, 8
    $region17: #{lstm_lm_forward.5} parent=1 // pred_fallthru
      _
    // Predicated region
    $region18: #{lstm_lm_forward.5} parent=1 // pred_check
      _
    $region19: #{lstm_lm_forward.5} parent=1 // pred_check_branch
      %72 = sbr.rel (0) target = $region21
    $region20: #{lstm_lm_forward.5} parent=1 // pred_region
      %74 = dma.done [#allocation3], 256
    $region21: #{lstm_lm_forward.5} parent=1 // pred_fallthru
      _
    %75 = vsyncpa [#allocation3], 1

// kernel: lstm_lm_forward.3
$region0: #{lstm_lm_forward.3}
  #allocation0 [shape = 'u32[]', space=smem, size = 0x4, offset = 0x4, fixed_abs, tag = 'smem constant byte address 0x4 - core index']
  #allocation1 [shape = 'u32[72,128]{1,0:T(1,128)}', space=vmem, size = 0x9000, scoped, tag = 'internal scratch']
  #allocation2 [shape = 'f32[8,2,128]{2,1,0:T(2,128)}', space=vmem, size = 0x2000, scoped, tag = 'scratch operand']
  #allocation3 [shape = 'f32[8,2,32]{2,1,0:T(2,128)}', space=vmem, size = 0x2000, scoped, tag = 'scratch operand']
  %s0 = inlined_call_operand.vmem [shape: f32[2,8,32], index: 0, kind: input, shape index: {}]
  %s1 = inlined_call_operand.vmem [shape: f32[2,32], index: 1, kind: input, shape index: {}]
  %s2 = inlined_call_operand.vmem [shape: f32[2,32], index: 2, kind: input, shape index: {}]
  %s3 = inlined_call_operand.vmem [shape: f32[32,128], index: 3, kind: input, shape index: {}]
  %s4 = inlined_call_operand.vmem [shape: f32[32,128], index: 4, kind: input, shape index: {}]
  %s5 = inlined_call_operand.vmem [shape: f32[1,128], index: 5, kind: input, shape index: {}]
  %s6 = inlined_call_operand.vmem [shape: f32[2,8,32], index: 6, kind: output, shape index: {0}]
  %s7 = inlined_call_operand.vmem [shape: f32[2,32], index: 7, kind: output, shape index: {1}]
  %s8 = inlined_call_operand.vmem [shape: f32[2,32], index: 8, kind: output, shape index: {2}]
  %9 = xla_tuple %s6, %s7, %s8
  %s10 = sld [smem:[#allocation0]]
  $region54: #{lstm_lm_forward.3} parent=0
    _
  %s12 = ssub.s32 1, %s10
  %s13 = scalar_select 0, %s12, %s10
  // Predicated region
  $region2: #{lstm_lm_forward.3} parent=0 // pred_check
    _
  $region3: #{lstm_lm_forward.3} parent=0 // pred_check_branch
    %15 = sbr.rel (0) target = $region5
  $region4: #{lstm_lm_forward.3} parent=0 // pred_region
    _
  $region5: #{lstm_lm_forward.3} parent=0 // pred_fallthru
    _
  // Predicated region
  $region6: #{lstm_lm_forward.3} parent=0 // pred_check
    _
  $region7: #{lstm_lm_forward.3} parent=0 // pred_check_branch
    %17 = sbr.rel (0) target = $region9
  $region8: #{lstm_lm_forward.3} parent=0 // pred_region
    _
  $region9: #{lstm_lm_forward.3} parent=0 // pred_fallthru
    _
  // Predicated region
  $region10: #{lstm_lm_forward.3} parent=0 // pred_check
    _
  $region11: #{lstm_lm_forward.3} parent=0 // pred_check_branch
    %19 = sbr.rel (0) target = $region13
  $region12: #{lstm_lm_forward.3} parent=0 // pred_region
    _
  $region13: #{lstm_lm_forward.3} parent=0 // pred_fallthru
    _
  // Predicated region
  $region14: #{lstm_lm_forward.3} parent=0 // pred_check
    _
  $region15: #{lstm_lm_forward.3} parent=0 // pred_check_branch
    %21 = sbr.rel (0) target = $region17
  $region16: #{lstm_lm_forward.3} parent=0 // pred_region
    _
  $region17: #{lstm_lm_forward.3} parent=0 // pred_fallthru
    _
  // Predicated region
  $region18: #{lstm_lm_forward.3} parent=0 // pred_check
    _
  $region19: #{lstm_lm_forward.3} parent=0 // pred_check_branch
    %23 = sbr.rel (0) target = $region21
  $region20: #{lstm_lm_forward.3} parent=0 // pred_region
    _
  $region21: #{lstm_lm_forward.3} parent=0 // pred_fallthru
    _
  // Predicated region
  $region22: #{lstm_lm_forward.3} parent=0 // pred_check
    _
  $region23: #{lstm_lm_forward.3} parent=0 // pred_check_branch
    %25 = sbr.rel (0) target = $region25
  $region24: #{lstm_lm_forward.3} parent=0 // pred_region
    _
  $region25: #{lstm_lm_forward.3} parent=0 // pred_fallthru
    _
  %p26 = scmp.eq.s32.totalorder 0, 0
  // Predicated region
  $region26: #{lstm_lm_forward.3} parent=0 // pred_check
    %p27 = pneg %p26
  $region27: #{lstm_lm_forward.3} parent=0 // pred_check_branch
    %29 = sbr.rel (%p27) target = $region29
  $region28: #{lstm_lm_forward.3} parent=0 // pred_region
    %v30 = vld [vmem:[%s1] sm:$0x3]
    %vm31 = vcmask 254976
    %32 = vst.msk [vmem:[%s7] sm:$0x3] %vm31, %v30
    %v33 = vld [vmem:[%s2] sm:$0x3]
    %34 = vst.msk [vmem:[%s8] sm:$0x3] %vm31, %v33
  $region29: #{lstm_lm_forward.3} parent=0 // pred_fallthru
    _
  %v35 = vld [vmem:[%s0] sm:$0xff]
  %v36 = vld [vmem:[%s0 + $0x8] sm:$0xff]
  %v37 = vrot.slane %v35, 4
  %vm38 = vcmask 1047556
  %v39 = vsel %vm38, 0.0, %v37
  %v41 = vunpack.c.l.s4 1983009808
  %v42 = vunpack.c.0.s8 %v41
  %v43 = vperm.slane %v35, %v42
  %v45 = vunpack.c.l.s4 1983009808
  %v46 = vunpack.c.0.s8 %v45
  %v47 = vperm.slane %v39, %v46
  %v48 = vrot.slane %v36, 4
  %v49 = vsel %vm38, 0.0, %v48
  %v51 = vunpack.c.l.s4 1983009808
  %v52 = vunpack.c.0.s8 %v51
  %v53 = vperm.slane %v36, %v52
  %v55 = vunpack.c.l.s4 1983009808
  %v56 = vunpack.c.0.s8 %v55
  %v57 = vperm.slane %v49, %v56
  %v58 = vrot.slane %v53, 4
  %v59 = vsel %vm38, %v58, %v43
  %v60 = vrot.slane %v43, 4
  %v61 = vsel %vm38, %v53, %v60
  %v63 = vunpack.c.l.s4 1934713408
  %v64 = vunpack.c.0.s8 %v63
  %v65 = vperm.slane %v59, %v64
  %v67 = vunpack.c.l.s4 1934713408
  %v68 = vunpack.c.0.s8 %v67
  %v69 = vperm.slane %v61, %v68
  %v70 = vrot.slane %v57, 4
  %v71 = vsel %vm38, %v70, %v47
  %v72 = vrot.slane %v47, 4
  %v73 = vsel %vm38, %v57, %v72
  %v75 = vunpack.c.l.s4 1934713408
  %v76 = vunpack.c.0.s8 %v75
  %v77 = vperm.slane %v71, %v76
  %v79 = vunpack.c.l.s4 1934713408
  %v80 = vunpack.c.0.s8 %v79
  %v81 = vperm.slane %v73, %v80
  %v82 = vrot.slane %v65, 4
  %v83 = vsel %vm38, 0.0, %v82
  %v84 = vrot.slane %v69, 4
  %v85 = vsel %vm38, 0.0, %v84
  %v86 = vrot.slane %v77, 4
  %v87 = vsel %vm38, 0.0, %v86
  %v88 = vrot.slane %v81, 4
  %v89 = vsel %vm38, 0.0, %v88
  %v90 = vld [vmem:[%s3] sm:$0xff]
  %v91 = vld [vmem:[%s3 + $0x8] sm:$0xff]
  %v92 = vld [vmem:[%s3 + $0x10] sm:$0xff]
  %v93 = vld [vmem:[%s3 + $0x18] sm:$0xff]
  %v94 = vld [vmem:[%s5] sm:$0x1]
  %v96 = vperm.slane %v94, 0
  %106 = vst [vmem:[#allocation1] ss:$4 sm:$0xff] %v65
  %s107 = scalar_lea.vmem [#allocation1], 1
  %108 = vst [vmem:[%s107] ss:$4 sm:$0xff] %v83
  %s109 = scalar_lea.vmem [#allocation1], 2
  %110 = vst [vmem:[%s109] ss:$4 sm:$0xff] %v69
  %s111 = scalar_lea.vmem [#allocation1], 3
  %112 = vst [vmem:[%s111] ss:$4 sm:$0xff] %v85
  %s113 = scalar_lea.vmem [#allocation1], 32
  %114 = vst [vmem:[%s113] ss:$4 sm:$0xff] %v77
  %s115 = scalar_lea.vmem [#allocation1], 33
  %116 = vst [vmem:[%s115] ss:$4 sm:$0xff] %v87
  %s117 = scalar_lea.vmem [#allocation1], 34
  %118 = vst [vmem:[%s117] ss:$4 sm:$0xff] %v81
  %s119 = scalar_lea.vmem [#allocation1], 35
  %120 = vst [vmem:[%s119] ss:$4 sm:$0xff] %v89
  %v121 = vld.sshfl [vmem:[#allocation1] sm:$0xff pattern:$0x73625140]
  %v122 = vld.sshfl [vmem:[#allocation1 + $0x20] sm:$0xff pattern:$0x73625140]
  %vm123 = vcmask 261120
  %v124 = vsel %vm123, %v121, 0
  %v126 = vsel %vm123, %v122, 0
  %128 = vmatpush.msra.mxu0 0.0
  %129 = vmatpush.msra.mxu0 0.0
  %130 = vmatpush.msra.mxu0 0.0
  %131 = vmatpush.msra.mxu0 0.0
  %132 = vmatpush.msra.mxu0 0.0
  %133 = vmatpush.msra.mxu0 0.0
  %134 = vmatpush.msra.mxu0 0.0
  %135 = vmatpush.msra.mxu0 0.0
  %136 = vmatpush.msra.mxu0 0.0
  %137 = vmatpush.msra.mxu0 0.0
  %138 = vmatpush.msra.mxu0 0.0
  %139 = vmatpush.msra.mxu0 0.0
  %140 = vmatpush.msra.mxu0 %v93
  %141 = vmatpush.msra.mxu0 %v92
  %142 = vmatpush.msra.mxu0 %v91
  %143 = vmatpush.msra.mxu0 %v90
  %144 = vmatmul.f32.gmra.mxu0 %v124
  %v145 = vpop.f32.mrf.mxu0
  %v146 = vadd.f32 %v96, %v145
  %147 = vmatmul.f32.gmra.mxu0 %v126
  %v148 = vpop.f32.mrf.mxu0
  %v149 = vadd.f32 %v96, %v148
  %150 = vdwg.mxu0
  %v153 = vrot.slane %v146, 2
  %v154 = vrot.slane %v146, 4
  %v155 = vrot.slane %v146, 6
  %v156 = vrot.slane %v149, 2
  %v157 = vrot.slane %v149, 4
  %v158 = vrot.slane %v149, 6
  %165 = vst [vmem:[#allocation2] sm:$0x3] %v146
  %166 = vst [vmem:[#allocation2 + $0x2] sm:$0x3] %v153
  %167 = vst [vmem:[#allocation2 + $0x4] sm:$0x3] %v154
  %168 = vst [vmem:[#allocation2 + $0x6] sm:$0x3] %v155
  %169 = vst [vmem:[#allocation2 + $0x8] sm:$0x3] %v149
  %170 = vst [vmem:[#allocation2 + $0xa] sm:$0x3] %v156
  %171 = vst [vmem:[#allocation2 + $0xc] sm:$0x3] %v157
  %172 = vst [vmem:[#allocation2 + $0xe] sm:$0x3] %v158
  %v173 = vld [vmem:[%s4] sm:$0xff]
  %v174 = vld [vmem:[%s4 + $0x8] sm:$0xff]
  %v175 = vld [vmem:[%s4 + $0x10] sm:$0xff]
  %v176 = vld [vmem:[%s4 + $0x18] sm:$0xff]
  %v177 = vld [vmem:[%s7] sm:$0x3]
  %v178 = vld [vmem:[%s8] sm:$0x3]
  %v179 = vld [vmem:[#allocation2] sm:$0x3]
  %v181 = vsel %vm123, %v177, 0
  %183 = vmatpush.msra.mxu0 0.0
  %184 = vmatpush.msra.mxu0 0.0
  %185 = vmatpush.msra.mxu0 0.0
  %186 = vmatpush.msra.mxu0 0.0
  %187 = vmatpush.msra.mxu0 0.0
  %188 = vmatpush.msra.mxu0 0.0
  %189 = vmatpush.msra.mxu0 0.0
  %190 = vmatpush.msra.mxu0 0.0
  %191 = vmatpush.msra.mxu0 0.0
  %192 = vmatpush.msra.mxu0 0.0
  %193 = vmatpush.msra.mxu0 0.0
  %194 = vmatpush.msra.mxu0 0.0
  %195 = vmatpush.msra.mxu0 %v176
  %196 = vmatpush.msra.mxu0 %v175
  %197 = vmatpush.msra.mxu0 %v174
  %198 = vmatpush.msra.mxu0 %v173
  %199 = vmatmul.f32.gmra.mxu0 %v181
  %v200 = vpop.f32.mrf.mxu0
  %v201 = vadd.f32 0.0, %v200
  %202 = vdwg.mxu0
  %v203 = vadd.f32 %v179, %v201
  %v204 = vmul.f32 %v203, 0.5
  %v205 = vtanh.pop %v204
  %v206 = vmul.f32 %v205, 0.5
  %v207 = vadd.f32 %v206, 0.5
  %v208 = vtanh.pop %v203
  %210 = vrot.lane.b32.xlu0 %v178, 32
  %v211 = vpop.permute.xlu0 %210
  %v213 = vmul.f32 %v207, %v211
  %215 = vrot.lane.b32.xlu0 %v208, 64
  %v216 = vpop.permute.xlu0 %215
  %v218 = vmul.f32 %v207, %v216
  %220 = vrot.lane.b32.xlu0 %v218, 32
  %v221 = vpop.permute.xlu0 %220
  %v223 = vadd.f32 %v213, %v221
  %v224 = vtanh.pop %v223
  %226 = vrot.lane.b32.xlu0 %v224, 64
  %v227 = vpop.permute.xlu0 %226
  %v229 = vmul.f32 %v207, %v227
  %231 = vrot.lane.b32.xlu0 %v229, 32
  %v232 = vpop.permute.xlu0 %231
  %vm234 = vcmask 254976
  %235 = vst.msk [vmem:[#allocation3] sm:$0x3] %vm234, %v232
  %s236 = scalar_lea.vmem [#allocation2], 2
  %v237 = vld [vmem:[%s236] sm:$0x3]
  %v238 = vsel %vm123, %v232, 0
  %240 = vmatpush.msra.mxu0 0.0
  %241 = vmatpush.msra.mxu0 0.0
  %242 = vmatpush.msra.mxu0 0.0
  %243 = vmatpush.msra.mxu0 0.0
  %244 = vmatpush.msra.mxu0 0.0
  %245 = vmatpush.msra.mxu0 0.0
  %246 = vmatpush.msra.mxu0 0.0
  %247 = vmatpush.msra.mxu0 0.0
  %248 = vmatpush.msra.mxu0 0.0
  %249 = vmatpush.msra.mxu0 0.0
  %250 = vmatpush.msra.mxu0 0.0
  %251 = vmatpush.msra.mxu0 0.0
  %252 = vmatpush.msra.mxu0 %v176
  %253 = vmatpush.msra.mxu0 %v175
  %254 = vmatpush.msra.mxu0 %v174
  %255 = vmatpush.msra.mxu0 %v173
  %256 = vmatmul.f32.gmra.mxu0 %v238
  %v257 = vpop.f32.mrf.mxu0
  %v258 = vadd.f32 0.0, %v257
  %259 = vdwg.mxu0
  %v260 = vadd.f32 %v237, %v258
  %v261 = vmul.f32 %v260, 0.5
  %v262 = vtanh.pop %v261
  %v263 = vmul.f32 %v262, 0.5
  %v264 = vadd.f32 %v263, 0.5
  %v265 = vtanh.pop %v260
  %v266 = vmul.f32 %v264, %v223
  %268 = vrot.lane.b32.xlu0 %v265, 64
  %v269 = vpop.permute.xlu0 %268
  %v271 = vmul.f32 %v264, %v269
  %273 = vrot.lane.b32.xlu0 %v271, 32
  %v274 = vpop.permute.xlu0 %273
  %v276 = vadd.f32 %v266, %v274
  %v277 = vtanh.pop %v276
  %279 = vrot.lane.b32.xlu0 %v277, 64
  %v280 = vpop.permute.xlu0 %279
  %v282 = vmul.f32 %v264, %v280
  %284 = vrot.lane.b32.xlu0 %v282, 32
  %v285 = vpop.permute.xlu0 %284
  %s287 = scalar_lea.vmem [#allocation3], 2
  %288 = vst.msk [vmem:[%s287] sm:$0x3] %vm234, %v285
  %s289 = scalar_lea.vmem [#allocation2], 4
  %v290 = vld [vmem:[%s289] sm:$0x3]
  %v291 = vsel %vm123, %v285, 0
  %293 = vmatpush.msra.mxu0 0.0
  %294 = vmatpush.msra.mxu0 0.0
  %295 = vmatpush.msra.mxu0 0.0
  %296 = vmatpush.msra.mxu0 0.0
  %297 = vmatpush.msra.mxu0 0.0
  %298 = vmatpush.msra.mxu0 0.0
  %299 = vmatpush.msra.mxu0 0.0
  %300 = vmatpush.msra.mxu0 0.0
  %301 = vmatpush.msra.mxu0 0.0
  %302 = vmatpush.msra.mxu0 0.0
  %303 = vmatpush.msra.mxu0 0.0
  %304 = vmatpush.msra.mxu0 0.0
  %305 = vmatpush.msra.mxu0 %v176
  %306 = vmatpush.msra.mxu0 %v175
  %307 = vmatpush.msra.mxu0 %v174
  %308 = vmatpush.msra.mxu0 %v173
  %309 = vmatmul.f32.gmra.mxu0 %v291
  %v310 = vpop.f32.mrf.mxu0
  %v311 = vadd.f32 0.0, %v310
  %312 = vdwg.mxu0
  %v313 = vadd.f32 %v290, %v311
  %v314 = vmul.f32 %v313, 0.5
  %v315 = vtanh.pop %v314
  %v316 = vmul.f32 %v315, 0.5
  %v317 = vadd.f32 %v316, 0.5
  %v318 = vtanh.pop %v313
  %v319 = vmul.f32 %v317, %v276
  %321 = vrot.lane.b32.xlu0 %v318, 64
  %v322 = vpop.permute.xlu0 %321
  %v324 = vmul.f32 %v317, %v322
  %326 = vrot.lane.b32.xlu0 %v324, 32
  %v327 = vpop.permute.xlu0 %326
  %v329 = vadd.f32 %v319, %v327
  %v330 = vtanh.pop %v329
  %332 = vrot.lane.b32.xlu0 %v330, 64
  %v333 = vpop.permute.xlu0 %332
  %v335 = vmul.f32 %v317, %v333
  %337 = vrot.lane.b32.xlu0 %v335, 32
  %v338 = vpop.permute.xlu0 %337
  %s340 = scalar_lea.vmem [#allocation3], 4
  %341 = vst.msk [vmem:[%s340] sm:$0x3] %vm234, %v338
  %s342 = scalar_lea.vmem [#allocation2], 6
  %v343 = vld [vmem:[%s342] sm:$0x3]
  %v344 = vsel %vm123, %v338, 0
  %346 = vmatpush.msra.mxu0 0.0
  %347 = vmatpush.msra.mxu0 0.0
  %348 = vmatpush.msra.mxu0 0.0
  %349 = vmatpush.msra.mxu0 0.0
  %350 = vmatpush.msra.mxu0 0.0
  %351 = vmatpush.msra.mxu0 0.0
  %352 = vmatpush.msra.mxu0 0.0
  %353 = vmatpush.msra.mxu0 0.0
  %354 = vmatpush.msra.mxu0 0.0
  %355 = vmatpush.msra.mxu0 0.0
  %356 = vmatpush.msra.mxu0 0.0
  %357 = vmatpush.msra.mxu0 0.0
  %358 = vmatpush.msra.mxu0 %v176
  %359 = vmatpush.msra.mxu0 %v175
  %360 = vmatpush.msra.mxu0 %v174
  %361 = vmatpush.msra.mxu0 %v173
  %362 = vmatmul.f32.gmra.mxu0 %v344
  %v363 = vpop.f32.mrf.mxu0
  %v364 = vadd.f32 0.0, %v363
  %365 = vdwg.mxu0
  %v366 = vadd.f32 %v343, %v364
  %v367 = vmul.f32 %v366, 0.5
  %v368 = vtanh.pop %v367
  %v369 = vmul.f32 %v368, 0.5
  %v370 = vadd.f32 %v369, 0.5
  %v371 = vtanh.pop %v366
  %v372 = vmul.f32 %v370, %v329
  %374 = vrot.lane.b32.xlu0 %v371, 64
  %v375 = vpop.permute.xlu0 %374
  %v377 = vmul.f32 %v370, %v375
  %379 = vrot.lane.b32.xlu0 %v377, 32
  %v380 = vpop.permute.xlu0 %379
  %v382 = vadd.f32 %v372, %v380
  %v383 = vtanh.pop %v382
  %385 = vrot.lane.b32.xlu0 %v383, 64
  %v386 = vpop.permute.xlu0 %385
  %v388 = vmul.f32 %v370, %v386
  %390 = vrot.lane.b32.xlu0 %v388, 32
  %v391 = vpop.permute.xlu0 %390
  %s393 = scalar_lea.vmem [#allocation3], 6
  %394 = vst.msk [vmem:[%s393] sm:$0x3] %vm234, %v391
  %s395 = scalar_lea.vmem [#allocation2], 8
  %v396 = vld [vmem:[%s395] sm:$0x3]
  %v397 = vsel %vm123, %v391, 0
  %399 = vmatpush.msra.mxu0 0.0
  %400 = vmatpush.msra.mxu0 0.0
  %401 = vmatpush.msra.mxu0 0.0
  %402 = vmatpush.msra.mxu0 0.0
  %403 = vmatpush.msra.mxu0 0.0
  %404 = vmatpush.msra.mxu0 0.0
  %405 = vmatpush.msra.mxu0 0.0
  %406 = vmatpush.msra.mxu0 0.0
  %407 = vmatpush.msra.mxu0 0.0
  %408 = vmatpush.msra.mxu0 0.0
  %409 = vmatpush.msra.mxu0 0.0
  %410 = vmatpush.msra.mxu0 0.0
  %411 = vmatpush.msra.mxu0 %v176
  %412 = vmatpush.msra.mxu0 %v175
  %413 = vmatpush.msra.mxu0 %v174
  %414 = vmatpush.msra.mxu0 %v173
  %415 = vmatmul.f32.gmra.mxu0 %v397
  %v416 = vpop.f32.mrf.mxu0
  %v417 = vadd.f32 0.0, %v416
  %418 = vdwg.mxu0
  %v419 = vadd.f32 %v396, %v417
  %v420 = vmul.f32 %v419, 0.5
  %v421 = vtanh.pop %v420
  %v422 = vmul.f32 %v421, 0.5
  %v423 = vadd.f32 %v422, 0.5
  %v424 = vtanh.pop %v419
  %v425 = vmul.f32 %v423, %v382
  %427 = vrot.lane.b32.xlu0 %v424, 64
  %v428 = vpop.permute.xlu0 %427
  %v430 = vmul.f32 %v423, %v428
  %432 = vrot.lane.b32.xlu0 %v430, 32
  %v433 = vpop.permute.xlu0 %432
  %v435 = vadd.f32 %v425, %v433
  %v436 = vtanh.pop %v435
  %438 = vrot.lane.b32.xlu0 %v436, 64
  %v439 = vpop.permute.xlu0 %438
  %v441 = vmul.f32 %v423, %v439
  %443 = vrot.lane.b32.xlu0 %v441, 32
  %v444 = vpop.permute.xlu0 %443
  %s446 = scalar_lea.vmem [#allocation3], 8
  %447 = vst.msk [vmem:[%s446] sm:$0x3] %vm234, %v444
  %s448 = scalar_lea.vmem [#allocation2], 10
  %v449 = vld [vmem:[%s448] sm:$0x3]
  %v450 = vsel %vm123, %v444, 0
  %452 = vmatpush.msra.mxu0 0.0
  %453 = vmatpush.msra.mxu0 0.0
  %454 = vmatpush.msra.mxu0 0.0
  %455 = vmatpush.msra.mxu0 0.0
  %456 = vmatpush.msra.mxu0 0.0
  %457 = vmatpush.msra.mxu0 0.0
  %458 = vmatpush.msra.mxu0 0.0
  %459 = vmatpush.msra.mxu0 0.0
  %460 = vmatpush.msra.mxu0 0.0
  %461 = vmatpush.msra.mxu0 0.0
  %462 = vmatpush.msra.mxu0 0.0
  %463 = vmatpush.msra.mxu0 0.0
  %464 = vmatpush.msra.mxu0 %v176
  %465 = vmatpush.msra.mxu0 %v175
  %466 = vmatpush.msra.mxu0 %v174
  %467 = vmatpush.msra.mxu0 %v173
  %468 = vmatmul.f32.gmra.mxu0 %v450
  %v469 = vpop.f32.mrf.mxu0
  %v470 = vadd.f32 0.0, %v469
  %471 = vdwg.mxu0
  %v472 = vadd.f32 %v449, %v470
  %v473 = vmul.f32 %v472, 0.5
  %v474 = vtanh.pop %v473
  %v475 = vmul.f32 %v474, 0.5
  %v476 = vadd.f32 %v475, 0.5
  %v477 = vtanh.pop %v472
  %v478 = vmul.f32 %v476, %v435
  %480 = vrot.lane.b32.xlu0 %v477, 64
  %v481 = vpop.permute.xlu0 %480
  %v483 = vmul.f32 %v476, %v481
  %485 = vrot.lane.b32.xlu0 %v483, 32
  %v486 = vpop.permute.xlu0 %485
  %v488 = vadd.f32 %v478, %v486
  %v489 = vtanh.pop %v488
  %491 = vrot.lane.b32.xlu0 %v489, 64
  %v492 = vpop.permute.xlu0 %491
  %v494 = vmul.f32 %v476, %v492
  %496 = vrot.lane.b32.xlu0 %v494, 32
  %v497 = vpop.permute.xlu0 %496
  %s499 = scalar_lea.vmem [#allocation3], 10
  %500 = vst.msk [vmem:[%s499] sm:$0x3] %vm234, %v497
  %s501 = scalar_lea.vmem [#allocation2], 12
  %v502 = vld [vmem:[%s501] sm:$0x3]
  %v503 = vsel %vm123, %v497, 0
  %505 = vmatpush.msra.mxu0 0.0
  %506 = vmatpush.msra.mxu0 0.0
  %507 = vmatpush.msra.mxu0 0.0
  %508 = vmatpush.msra.mxu0 0.0
  %509 = vmatpush.msra.mxu0 0.0
  %510 = vmatpush.msra.mxu0 0.0
  %511 = vmatpush.msra.mxu0 0.0
  %512 = vmatpush.msra.mxu0 0.0
  %513 = vmatpush.msra.mxu0 0.0
  %514 = vmatpush.msra.mxu0 0.0
  %515 = vmatpush.msra.mxu0 0.0
  %516 = vmatpush.msra.mxu0 0.0
  %517 = vmatpush.msra.mxu0 %v176
  %518 = vmatpush.msra.mxu0 %v175
  %519 = vmatpush.msra.mxu0 %v174
  %520 = vmatpush.msra.mxu0 %v173
  %521 = vmatmul.f32.gmra.mxu0 %v503
  %v522 = vpop.f32.mrf.mxu0
  %v523 = vadd.f32 0.0, %v522
  %524 = vdwg.mxu0
  %v525 = vadd.f32 %v502, %v523
  %v526 = vmul.f32 %v525, 0.5
  %v527 = vtanh.pop %v526
  %v528 = vmul.f32 %v527, 0.5
  %v529 = vadd.f32 %v528, 0.5
  %v530 = vtanh.pop %v525
  %v531 = vmul.f32 %v529, %v488
  %533 = vrot.lane.b32.xlu0 %v530, 64
  %v534 = vpop.permute.xlu0 %533
  %v536 = vmul.f32 %v529, %v534
  %538 = vrot.lane.b32.xlu0 %v536, 32
  %v539 = vpop.permute.xlu0 %538
  %v541 = vadd.f32 %v531, %v539
  %v542 = vtanh.pop %v541
  %544 = vrot.lane.b32.xlu0 %v542, 64
  %v545 = vpop.permute.xlu0 %544
  %v547 = vmul.f32 %v529, %v545
  %549 = vrot.lane.b32.xlu0 %v547, 32
  %v550 = vpop.permute.xlu0 %549
  %s552 = scalar_lea.vmem [#allocation3], 12
  %553 = vst.msk [vmem:[%s552] sm:$0x3] %vm234, %v550
  %s554 = scalar_lea.vmem [#allocation2], 14
  %v555 = vld [vmem:[%s554] sm:$0x3]
  %v556 = vsel %vm123, %v550, 0
  %558 = vmatpush.msra.mxu0 0.0
  %559 = vmatpush.msra.mxu0 0.0
  %560 = vmatpush.msra.mxu0 0.0
  %561 = vmatpush.msra.mxu0 0.0
  %562 = vmatpush.msra.mxu0 0.0
  %563 = vmatpush.msra.mxu0 0.0
  %564 = vmatpush.msra.mxu0 0.0
  %565 = vmatpush.msra.mxu0 0.0
  %566 = vmatpush.msra.mxu0 0.0
  %567 = vmatpush.msra.mxu0 0.0
  %568 = vmatpush.msra.mxu0 0.0
  %569 = vmatpush.msra.mxu0 0.0
  %570 = vmatpush.msra.mxu0 %v176
  %571 = vmatpush.msra.mxu0 %v175
  %572 = vmatpush.msra.mxu0 %v174
  %573 = vmatpush.msra.mxu0 %v173
  %574 = vmatmul.f32.gmra.mxu0 %v556
  %v575 = vpop.f32.mrf.mxu0
  %v576 = vadd.f32 0.0, %v575
  %577 = vdwg.mxu0
  %v578 = vadd.f32 %v555, %v576
  %v579 = vmul.f32 %v578, 0.5
  %v580 = vtanh.pop %v579
  %v581 = vmul.f32 %v580, 0.5
  %v582 = vadd.f32 %v581, 0.5
  %v583 = vtanh.pop %v578
  %v584 = vmul.f32 %v582, %v541
  %586 = vrot.lane.b32.xlu0 %v583, 64
  %v587 = vpop.permute.xlu0 %586
  %v589 = vmul.f32 %v582, %v587
  %591 = vrot.lane.b32.xlu0 %v589, 32
  %v592 = vpop.permute.xlu0 %591
  %v594 = vadd.f32 %v584, %v592
  %v595 = vtanh.pop %v594
  %597 = vrot.lane.b32.xlu0 %v595, 64
  %v598 = vpop.permute.xlu0 %597
  %v600 = vmul.f32 %v582, %v598
  %602 = vrot.lane.b32.xlu0 %v600, 32
  %v603 = vpop.permute.xlu0 %602
  %s605 = scalar_lea.vmem [#allocation3], 14
  %606 = vst.msk [vmem:[%s605] sm:$0x3] %vm234, %v603
  %607 = vst.msk [vmem:[%s7] sm:$0x3] %vm234, %v603
  %609 = vrot.lane.b32.xlu0 %v594, 96
  %v610 = vpop.permute.xlu0 %609
  %612 = vst.msk [vmem:[%s8] sm:$0x3] %vm234, %v610
  %v613 = vld [vmem:[#allocation3] sm:$0x3]
  %v614 = vld [vmem:[#allocation3 + $0x2] sm:$0x3]
  %v615 = vld [vmem:[#allocation3 + $0x4] sm:$0x3]
  %v616 = vld [vmem:[#allocation3 + $0x6] sm:$0x3]
  %v617 = vld [vmem:[#allocation3 + $0x8] sm:$0x3]
  %v618 = vld [vmem:[#allocation3 + $0xa] sm:$0x3]
  %v619 = vld [vmem:[#allocation3 + $0xc] sm:$0x3]
  %v620 = vld [vmem:[#allocation3 + $0xe] sm:$0x3]
  %v621 = vrot.slane %v615, 4
  %v622 = vsel %vm38, %v621, %v613
  %v624 = vunpack.c.l.s4 1983009808
  %v625 = vunpack.c.0.s8 %v624
  %v626 = vperm.slane %v622, %v625
  %v627 = vrot.slane %v616, 4
  %v628 = vsel %vm38, %v627, %v614
  %v630 = vunpack.c.l.s4 1983009808
  %v631 = vunpack.c.0.s8 %v630
  %v632 = vperm.slane %v628, %v631
  %v633 = vrot.slane %v619, 4
  %v634 = vsel %vm38, %v633, %v617
  %v636 = vunpack.c.l.s4 1983009808
  %v637 = vunpack.c.0.s8 %v636
  %v638 = vperm.slane %v634, %v637
  %v639 = vrot.slane %v620, 4
  %v640 = vsel %vm38, %v639, %v618
  %v642 = vunpack.c.l.s4 1983009808
  %v643 = vunpack.c.0.s8 %v642
  %v644 = vperm.slane %v640, %v643
  %v645 = vrot.slane %v632, 4
  %v646 = vsel %vm38, %v645, %v626
  %v648 = vunpack.c.l.s4 1934713408
  %v649 = vunpack.c.0.s8 %v648
  %v650 = vperm.slane %v646, %v649
  %v651 = vrot.slane %v644, 4
  %v652 = vsel %vm38, %v651, %v638
  %v654 = vunpack.c.l.s4 1934713408
  %v655 = vunpack.c.0.s8 %v654
  %v656 = vperm.slane %v652, %v655
  %v657 = vrot.slane %v656, 4
  %v658 = vsel %vm38, %v657, %v650
  %v659 = vrot.slane %v650, 4
  %v660 = vsel %vm38, %v656, %v659
  %661 = vst.msk [vmem:[%s6] sm:$0xff] %vm123, %v658
  %662 = vst.msk [vmem:[%s6 + $0x8] sm:$0xff] %vm123, %v660
  // Predicated region
  $region30: #{lstm_lm_forward.3} parent=0 // pred_check
    _
  $region31: #{lstm_lm_forward.3} parent=0 // pred_check_branch
    %664 = sbr.rel (0) target = $region33
  $region32: #{lstm_lm_forward.3} parent=0 // pred_region
    _
  $region33: #{lstm_lm_forward.3} parent=0 // pred_fallthru
    _
  // Predicated region
  $region34: #{lstm_lm_forward.3} parent=0 // pred_check
    _
  $region35: #{lstm_lm_forward.3} parent=0 // pred_check_branch
    %666 = sbr.rel (0) target = $region37
  $region36: #{lstm_lm_forward.3} parent=0 // pred_region
    _
  $region37: #{lstm_lm_forward.3} parent=0 // pred_fallthru
    _
  // Predicated region
  $region38: #{lstm_lm_forward.3} parent=0 // pred_check
    _
  $region39: #{lstm_lm_forward.3} parent=0 // pred_check_branch
    %668 = sbr.rel (0) target = $region41
  $region40: #{lstm_lm_forward.3} parent=0 // pred_region
    _
  $region41: #{lstm_lm_forward.3} parent=0 // pred_fallthru
    _
  // Predicated region
  $region42: #{lstm_lm_forward.3} parent=0 // pred_check
    _
  $region43: #{lstm_lm_forward.3} parent=0 // pred_check_branch
    %670 = sbr.rel (0) target = $region45
  $region44: #{lstm_lm_forward.3} parent=0 // pred_region
    _
  $region45: #{lstm_lm_forward.3} parent=0 // pred_fallthru
    _
  // Predicated region
  $region46: #{lstm_lm_forward.3} parent=0 // pred_check
    _
  $region47: #{lstm_lm_forward.3} parent=0 // pred_check_branch
    %672 = sbr.rel (0) target = $region49
  $region48: #{lstm_lm_forward.3} parent=0 // pred_region
    _
  $region49: #{lstm_lm_forward.3} parent=0 // pred_fallthru
    _
  // Predicated region
  $region50: #{lstm_lm_forward.3} parent=0 // pred_check
    _
  $region51: #{lstm_lm_forward.3} parent=0 // pred_check_branch
    %674 = sbr.rel (0) target = $region53
  $region52: #{lstm_lm_forward.3} parent=0 // pred_region
    _
  $region53: #{lstm_lm_forward.3} parent=0 // pred_fallthru
    _

</llo_original>
